<compile_context>
chip_gen: v5e
topology: v5e:2x2
jax: 0.10.0
libtpu: 0.0.40
codegen_flags: <defaults>
</compile_context>

<pallas_src>
import numpy as np
import jax
import jax.numpy as jnp
from jax import lax
from jax.experimental import pallas as pl
from jax.experimental.pallas import tpu as pltpu

# Problem configuration (small shapes consistent with the module).
N, INC, MIDC, OUTC = 2, 4, 8, 4
H = W = 16
HW = H * W                       # 256 interior positions per image (2 x 128)
HP, WP = H + 2, W + 2            # zero-padded spatial dims for the 3x3 convs
L = HP * WP                      # flattened padded size per image (324)
LPIMG = 384                      # per-image lane slot, padded to a 128-multiple
LL = N * LPIMG                   # fused lane extent (768)
HALO = 128                       # zero halo on each side of the conv scratch
CIN_PAD = 8                      # conv1 Cin padded to one f32 sublane tile
BN_EPS = 1e-5                    # PyTorch BatchNorm2d default eps

# Invariants the fused-batch / padded-lane layout relies on:
#  * per-image slot and fused extent are 128-multiples (lane-dense ops),
#  * the zero tail of each image slot is at least one tap shift (WP+1) wide,
#    so cross-image / end-of-buffer taps always read zeros.
assert LPIMG % 128 == 0 and LL % 128 == 0 and HW % 128 == 0
assert LPIMG - L >= WP + 1
assert CIN_PAD == MIDC == 8 and INC == OUTC  # identity residual, one scratch


def _im2col(ext_ref):
    """9 static lane-shifted views of the scratch, stacked on sublanes.

    Each tap chunk is (8, LL) f32 = whole (8,128) tiles, so the axis-0 concat
    stacks tile-aligned chunks (no per-tap sublane shuffles).
    """
    return jnp.concatenate(
        [ext_ref[:, HALO + dy * WP + dx: HALO + dy * WP + dx + LL]
         for dy in (-1, 0, 1) for dx in (-1, 0, 1)],
        axis=0)                                              # (72, LL) f32


def resbl_kernel(x_ref, mask_ref, w1_ref, w2_ref, b1_ref, b2_ref, o_ref,
                 ext_ref):
    x = x_ref[...]                                           # (N, INC, HW) f32
    mask = mask_ref[...]                                     # (1, LL) f32

    # ---- in-kernel zero padding: scatter interior rows into the scratch ----
    # ext layout: [HALO zeros | image0 padded-flat (324) + zero tail (60)
    #              | image1 padded-flat + tail | HALO zeros], channels 4..7
    # stay zero (conv1 Cin pad).
    ext_ref[...] = jnp.zeros_like(ext_ref)
    for n in range(N):
        for r in range(H):
            dst = HALO + n * LPIMG + (r + 1) * WP + 1
            ext_ref[0:INC, dst:dst + W] = x[n, :, r * W:(r + 1) * W]

    # ---- conv1 (BN1 scale folded into w1) + bias + relu -------------------
    # One im2col MXU matmul: (MIDC, 72) @ (72, LL), f32 operands & accum.
    h1 = jnp.dot(w1_ref[...], _im2col(ext_ref),
                 preferred_element_type=jnp.float32)         # (MIDC, LL)
    h1 = jnp.maximum(h1 + b1_ref[...], 0.0)

    # Zero the padding ring / tail lanes so conv2 sees proper zero padding,
    # then overwrite the scratch middle (halos stay zero; lane-aligned store).
    ext_ref[:, HALO:HALO + LL] = h1 * mask

    # ---- conv2 (BN2 scale folded into w2) + bias ---------------------------
    h2 = jnp.dot(w2_ref[...], _im2col(ext_ref),
                 preferred_element_type=jnp.float32)         # (OUTC, LL)
    h2 = h2 + b2_ref[...]

    # ---- residual (identity = x) + relu, interior-only lane-dense output ---
    for n in range(N):
        rows = []
        for r in range(H):
            src = n * LPIMG + (r + 1) * WP + 1
            rows.append(h2[:, src:src + W] + x[n, :, r * W:(r + 1) * W])
        o_ref[n] = jnp.maximum(jnp.concatenate(rows, axis=1), 0.0)  # (OUTC, HW)


def fold_params(w1, w2, s1, b1, s2, b2):
    """One-time conversion of HWIO weights + folded BN into kernel layout."""
    # Pad conv1's Cin 4 -> 8 so every im2col tap chunk is one sublane tile;
    # padded weight rows are zero, so the matmul result is unchanged.
    w1p = jnp.pad(w1, ((0, 0), (0, 0), (0, CIN_PAD - INC), (0, 0)))
    w1t = (w1p * s1).reshape(9 * CIN_PAD, MIDC).T.astype(jnp.float32)  # (8, 72)
    w2t = (w2 * s2).reshape(9 * MIDC, OUTC).T.astype(jnp.float32)      # (4, 72)
    b1c = b1.reshape(MIDC, 1).astype(jnp.float32)
    b2c = b2.reshape(OUTC, 1).astype(jnp.float32)
    # Static interior mask over the fused padded-flat lane layout
    # (1 inside the original HxW, 0 on the padding ring and the lane tail).
    ring = np.zeros((HP, WP), np.float32)
    ring[1:-1, 1:-1] = 1.0
    m = np.zeros((N, LPIMG), np.float32)
    m[:, :L] = ring.reshape(-1)
    mask = jnp.asarray(m.reshape(1, LL))
    return w1t, w2t, b1c, b2c, mask


@jax.jit
def resbl_forward(x_nchw, w1t, w2t, b1c, b2c, mask):
    x_flat = x_nchw.reshape(N, INC, HW)        # contiguous -> free reshape
    out = pl.pallas_call(
        resbl_kernel,
        out_shape=jax.ShapeDtypeStruct((N, OUTC, HW), jnp.float32),
        grid_spec=pltpu.PrefetchScalarGridSpec(
            num_scalar_prefetch=0,
            grid=(1,),                         # single fused step on one core
            in_specs=[
                pl.BlockSpec((N, INC, HW), lambda i: (0, 0, 0)),
                pl.BlockSpec((1, LL), lambda i: (0, 0)),
                pl.BlockSpec((MIDC, 9 * CIN_PAD), lambda i: (0, 0)),
                pl.BlockSpec((OUTC, 9 * MIDC), lambda i: (0, 0)),
                pl.BlockSpec((MIDC, 1), lambda i: (0, 0)),
                pl.BlockSpec((OUTC, 1), lambda i: (0, 0)),
            ],
            out_specs=pl.BlockSpec((N, OUTC, HW), lambda i: (0, 0, 0)),
            scratch_shapes=[
                pltpu.VMEM((CIN_PAD, HALO + LL + HALO), jnp.float32)],
        ),
        compiler_params=pltpu.CompilerParams(
            dimension_semantics=("arbitrary",)),
    )(x_flat, mask, w1t, w2t, b1c, b2c)
    return out.reshape(N, OUTC, H, W)          # contiguous -> free reshape


def make_params(key):
    """Deterministic synthetic parameters (weights HWIO, eval-mode BN folded
    into per-output-channel scale s and bias b:  bn(y) = y*s + b)."""
    ks = jax.random.split(key, 10)
    w1 = 0.1 * jax.random.normal(ks[0], (3, 3, INC, MIDC), jnp.float32)
    w2 = 0.1 * jax.random.normal(ks[1], (3, 3, MIDC, OUTC), jnp.float32)
    g1 = 1.0 + 0.1 * jax.random.normal(ks[2], (MIDC,), jnp.float32)
    be1 = 0.1 * jax.random.normal(ks[3], (MIDC,), jnp.float32)
    m1 = 0.1 * jax.random.normal(ks[4], (MIDC,), jnp.float32)
    v1 = 1.0 + 0.1 * jnp.abs(jax.random.normal(ks[5], (MIDC,), jnp.float32))
    g2 = 1.0 + 0.1 * jax.random.normal(ks[6], (OUTC,), jnp.float32)
    be2 = 0.1 * jax.random.normal(ks[7], (OUTC,), jnp.float32)
    m2 = 0.1 * jax.random.normal(ks[8], (OUTC,), jnp.float32)
    v2 = 1.0 + 0.1 * jnp.abs(jax.random.normal(ks[9], (OUTC,), jnp.float32))
    s1 = g1 / jnp.sqrt(v1 + BN_EPS)
    b1 = be1 - m1 * s1
    s2 = g2 / jnp.sqrt(v2 + BN_EPS)
    b2 = be2 - m2 * s2
    return w1, w2, s1, b1, s2, b2


def resbl_reference_f32(x_nchw, w1, w2, s1, b1, s2, b2):
    """Pure-f32 JAX reference of the module forward (exact semantics)."""
    x = jnp.transpose(x_nchw, (0, 2, 3, 1))
    dn = ("NHWC", "HWIO", "NHWC")
    y = lax.conv_general_dilated(x, w1, (1, 1), "SAME", dimension_numbers=dn)
    y = jnp.maximum(y * s1 + b1, 0.0)
    y = lax.conv_general_dilated(y, w2, (1, 1), "SAME", dimension_numbers=dn)
    y = jnp.maximum(y * s2 + b2 + x, 0.0)
    return jnp.transpose(y, (0, 3, 1, 2))


if __name__ == "__main__":
    key = jax.random.PRNGKey(0)
    kx, kp = jax.random.split(key)
    x = jax.random.normal(kx, (N, INC, H, W), jnp.float32)
    params = make_params(kp)
    folded = fold_params(*params)              # one-time weight/BN folding

    out = resbl_forward(x, *folded)
    out = jax.block_until_ready(out)
    assert out.shape == (N, OUTC, H, W)

    ref = resbl_reference_f32(x, *params)
    if not jnp.allclose(out, ref, atol=2e-2, rtol=2e-2):
        raise AssertionError(
            "mismatch vs f32 reference, max abs err = %e"
            % float(jnp.max(jnp.abs(out - ref))))

    print("KERNEL_OK")
</pallas_src>

<mosaic_0001>
module attributes {stable_mosaic.version = 11 : i64} {
  func.func @resbl_kernel(%arg0: i32, %arg1: memref<2x4x256xf32, #tpu.memory_space<vmem>>, %arg2: memref<1x768xf32, #tpu.memory_space<vmem>>, %arg3: memref<8x72xf32, #tpu.memory_space<vmem>>, %arg4: memref<4x72xf32, #tpu.memory_space<vmem>>, %arg5: memref<8x1xf32, #tpu.memory_space<vmem>>, %arg6: memref<4x1xf32, #tpu.memory_space<vmem>>, %arg7: memref<2x4x256xf32, #tpu.memory_space<vmem>>, %arg8: memref<8x1024xf32, #tpu.memory_space<vmem>>) attributes {dimension_semantics = [#tpu.dimension_semantics<arbitrary>], iteration_bounds = array<i64: 1>, scalar_prefetch = 0 : i64, scratch_operands = 1 : i64, tpu.core_type = #tpu.core_type<tc>, window_params = [{pipeline_mode = #tpu.pipeline_mode<synchronous>, transform_indices = @transform_0, window_bounds = array<i64: 2, 4, 256>}, {pipeline_mode = #tpu.pipeline_mode<synchronous>, transform_indices = @transform_1, window_bounds = array<i64: 1, 768>}, {pipeline_mode = #tpu.pipeline_mode<synchronous>, transform_indices = @transform_2, window_bounds = array<i64: 8, 72>}, {pipeline_mode = #tpu.pipeline_mode<synchronous>, transform_indices = @transform_3, window_bounds = array<i64: 4, 72>}, {pipeline_mode = #tpu.pipeline_mode<synchronous>, transform_indices = @transform_4, window_bounds = array<i64: 8, 1>}, {pipeline_mode = #tpu.pipeline_mode<synchronous>, transform_indices = @transform_5, window_bounds = array<i64: 4, 1>}, {pipeline_mode = #tpu.pipeline_mode<synchronous>, transform_indices = @transform_6, window_bounds = array<i64: 2, 4, 256>}]} {
    %c0 = arith.constant 0 : index
    %c0_0 = arith.constant 0 : index
    %c0_1 = arith.constant 0 : index
    %0 = vector.load %arg1[%c0, %c0_0, %c0_1] : memref<2x4x256xf32, #tpu.memory_space<vmem>>, vector<2x4x256xf32>
    %c0_2 = arith.constant 0 : index
    %c0_3 = arith.constant 0 : index
    %1 = vector.load %arg2[%c0_2, %c0_3] : memref<1x768xf32, #tpu.memory_space<vmem>>, vector<1x768xf32>
    %cst = arith.constant 0.000000e+00 : f32
    %2 = vector.broadcast %cst : f32 to vector<8x1024xf32>
    %c0_4 = arith.constant 0 : index
    %c0_5 = arith.constant 0 : index
    %3 = vector.load %arg8[%c0_4, %c0_5] : memref<8x1024xf32, #tpu.memory_space<vmem>>, vector<8x1024xf32>
    tpu.vector_store %arg8[%c0_4, %c0_5], %2 {strides = array<i32>} : memref<8x1024xf32, #tpu.memory_space<vmem>>, vector<8x1024xf32>,
    %4 = vector.extract_strided_slice %0 {offsets = [0, 0, 0], sizes = [1, 4, 16], strides = [1, 1, 1]} : vector<2x4x256xf32> to vector<1x4x16xf32>
    %5 = vector.shape_cast %4 : vector<1x4x16xf32> to vector<4x16xf32>
    %c0_6 = arith.constant 0 : index
    %c147 = arith.constant 147 : index
    %6 = vector.load %arg8[%c0_6, %c147] : memref<8x1024xf32, #tpu.memory_space<vmem>>, vector<4x16xf32>
    tpu.vector_store %arg8[%c0_6, %c147], %5 {strides = array<i32>} : memref<8x1024xf32, #tpu.memory_space<vmem>>, vector<4x16xf32>,
    %7 = vector.extract_strided_slice %0 {offsets = [0, 0, 16], sizes = [1, 4, 16], strides = [1, 1, 1]} : vector<2x4x256xf32> to vector<1x4x16xf32>
    %8 = vector.shape_cast %7 : vector<1x4x16xf32> to vector<4x16xf32>
    %c0_7 = arith.constant 0 : index
    %c165 = arith.constant 165 : index
    %9 = vector.load %arg8[%c0_7, %c165] : memref<8x1024xf32, #tpu.memory_space<vmem>>, vector<4x16xf32>
    tpu.vector_store %arg8[%c0_7, %c165], %8 {strides = array<i32>} : memref<8x1024xf32, #tpu.memory_space<vmem>>, vector<4x16xf32>,
    %10 = vector.extract_strided_slice %0 {offsets = [0, 0, 32], sizes = [1, 4, 16], strides = [1, 1, 1]} : vector<2x4x256xf32> to vector<1x4x16xf32>
    %11 = vector.shape_cast %10 : vector<1x4x16xf32> to vector<4x16xf32>
    %c0_8 = arith.constant 0 : index
    %c183 = arith.constant 183 : index
    %12 = vector.load %arg8[%c0_8, %c183] : memref<8x1024xf32, #tpu.memory_space<vmem>>, vector<4x16xf32>
    tpu.vector_store %arg8[%c0_8, %c183], %11 {strides = array<i32>} : memref<8x1024xf32, #tpu.memory_space<vmem>>, vector<4x16xf32>,
    %13 = vector.extract_strided_slice %0 {offsets = [0, 0, 48], sizes = [1, 4, 16], strides = [1, 1, 1]} : vector<2x4x256xf32> to vector<1x4x16xf32>
    %14 = vector.shape_cast %13 : vector<1x4x16xf32> to vector<4x16xf32>
    %c0_9 = arith.constant 0 : index
    %c201 = arith.constant 201 : index
    %15 = vector.load %arg8[%c0_9, %c201] : memref<8x1024xf32, #tpu.memory_space<vmem>>, vector<4x16xf32>
    tpu.vector_store %arg8[%c0_9, %c201], %14 {strides = array<i32>} : memref<8x1024xf32, #tpu.memory_space<vmem>>, vector<4x16xf32>,
    %16 = vector.extract_strided_slice %0 {offsets = [0, 0, 64], sizes = [1, 4, 16], strides = [1, 1, 1]} : vector<2x4x256xf32> to vector<1x4x16xf32>
    %17 = vector.shape_cast %16 : vector<1x4x16xf32> to vector<4x16xf32>
    %c0_10 = arith.constant 0 : index
    %c219 = arith.constant 219 : index
    %18 = vector.load %arg8[%c0_10, %c219] : memref<8x1024xf32, #tpu.memory_space<vmem>>, vector<4x16xf32>
    tpu.vector_store %arg8[%c0_10, %c219], %17 {strides = array<i32>} : memref<8x1024xf32, #tpu.memory_space<vmem>>, vector<4x16xf32>,
    %19 = vector.extract_strided_slice %0 {offsets = [0, 0, 80], sizes = [1, 4, 16], strides = [1, 1, 1]} : vector<2x4x256xf32> to vector<1x4x16xf32>
    %20 = vector.shape_cast %19 : vector<1x4x16xf32> to vector<4x16xf32>
    %c0_11 = arith.constant 0 : index
    %c237 = arith.constant 237 : index
    %21 = vector.load %arg8[%c0_11, %c237] : memref<8x1024xf32, #tpu.memory_space<vmem>>, vector<4x16xf32>
    tpu.vector_store %arg8[%c0_11, %c237], %20 {strides = array<i32>} : memref<8x1024xf32, #tpu.memory_space<vmem>>, vector<4x16xf32>,
    %22 = vector.extract_strided_slice %0 {offsets = [0, 0, 96], sizes = [1, 4, 16], strides = [1, 1, 1]} : vector<2x4x256xf32> to vector<1x4x16xf32>
    %23 = vector.shape_cast %22 : vector<1x4x16xf32> to vector<4x16xf32>
    %c0_12 = arith.constant 0 : index
    %c255 = arith.constant 255 : index
    %24 = vector.load %arg8[%c0_12, %c255] : memref<8x1024xf32, #tpu.memory_space<vmem>>, vector<4x16xf32>
    tpu.vector_store %arg8[%c0_12, %c255], %23 {strides = array<i32>} : memref<8x1024xf32, #tpu.memory_space<vmem>>, vector<4x16xf32>,
    %25 = vector.extract_strided_slice %0 {offsets = [0, 0, 112], sizes = [1, 4, 16], strides = [1, 1, 1]} : vector<2x4x256xf32> to vector<1x4x16xf32>
    %26 = vector.shape_cast %25 : vector<1x4x16xf32> to vector<4x16xf32>
    %c0_13 = arith.constant 0 : index
    %c273 = arith.constant 273 : index
    %27 = vector.load %arg8[%c0_13, %c273] : memref<8x1024xf32, #tpu.memory_space<vmem>>, vector<4x16xf32>
    tpu.vector_store %arg8[%c0_13, %c273], %26 {strides = array<i32>} : memref<8x1024xf32, #tpu.memory_space<vmem>>, vector<4x16xf32>,
    %28 = vector.extract_strided_slice %0 {offsets = [0, 0, 128], sizes = [1, 4, 16], strides = [1, 1, 1]} : vector<2x4x256xf32> to vector<1x4x16xf32>
    %29 = vector.shape_cast %28 : vector<1x4x16xf32> to vector<4x16xf32>
    %c0_14 = arith.constant 0 : index
    %c291 = arith.constant 291 : index
    %30 = vector.load %arg8[%c0_14, %c291] : memref<8x1024xf32, #tpu.memory_space<vmem>>, vector<4x16xf32>
    tpu.vector_store %arg8[%c0_14, %c291], %29 {strides = array<i32>} : memref<8x1024xf32, #tpu.memory_space<vmem>>, vector<4x16xf32>,
    %31 = vector.extract_strided_slice %0 {offsets = [0, 0, 144], sizes = [1, 4, 16], strides = [1, 1, 1]} : vector<2x4x256xf32> to vector<1x4x16xf32>
    %32 = vector.shape_cast %31 : vector<1x4x16xf32> to vector<4x16xf32>
    %c0_15 = arith.constant 0 : index
    %c309 = arith.constant 309 : index
    %33 = vector.load %arg8[%c0_15, %c309] : memref<8x1024xf32, #tpu.memory_space<vmem>>, vector<4x16xf32>
    tpu.vector_store %arg8[%c0_15, %c309], %32 {strides = array<i32>} : memref<8x1024xf32, #tpu.memory_space<vmem>>, vector<4x16xf32>,
    %34 = vector.extract_strided_slice %0 {offsets = [0, 0, 160], sizes = [1, 4, 16], strides = [1, 1, 1]} : vector<2x4x256xf32> to vector<1x4x16xf32>
    %35 = vector.shape_cast %34 : vector<1x4x16xf32> to vector<4x16xf32>
    %c0_16 = arith.constant 0 : index
    %c327 = arith.constant 327 : index
    %36 = vector.load %arg8[%c0_16, %c327] : memref<8x1024xf32, #tpu.memory_space<vmem>>, vector<4x16xf32>
    tpu.vector_store %arg8[%c0_16, %c327], %35 {strides = array<i32>} : memref<8x1024xf32, #tpu.memory_space<vmem>>, vector<4x16xf32>,
    %37 = vector.extract_strided_slice %0 {offsets = [0, 0, 176], sizes = [1, 4, 16], strides = [1, 1, 1]} : vector<2x4x256xf32> to vector<1x4x16xf32>
    %38 = vector.shape_cast %37 : vector<1x4x16xf32> to vector<4x16xf32>
    %c0_17 = arith.constant 0 : index
    %c345 = arith.constant 345 : index
    %39 = vector.load %arg8[%c0_17, %c345] : memref<8x1024xf32, #tpu.memory_space<vmem>>, vector<4x16xf32>
    tpu.vector_store %arg8[%c0_17, %c345], %38 {strides = array<i32>} : memref<8x1024xf32, #tpu.memory_space<vmem>>, vector<4x16xf32>,
    %40 = vector.extract_strided_slice %0 {offsets = [0, 0, 192], sizes = [1, 4, 16], strides = [1, 1, 1]} : vector<2x4x256xf32> to vector<1x4x16xf32>
    %41 = vector.shape_cast %40 : vector<1x4x16xf32> to vector<4x16xf32>
    %c0_18 = arith.constant 0 : index
    %c363 = arith.constant 363 : index
    %42 = vector.load %arg8[%c0_18, %c363] : memref<8x1024xf32, #tpu.memory_space<vmem>>, vector<4x16xf32>
    tpu.vector_store %arg8[%c0_18, %c363], %41 {strides = array<i32>} : memref<8x1024xf32, #tpu.memory_space<vmem>>, vector<4x16xf32>,
    %43 = vector.extract_strided_slice %0 {offsets = [0, 0, 208], sizes = [1, 4, 16], strides = [1, 1, 1]} : vector<2x4x256xf32> to vector<1x4x16xf32>
    %44 = vector.shape_cast %43 : vector<1x4x16xf32> to vector<4x16xf32>
    %c0_19 = arith.constant 0 : index
    %c381 = arith.constant 381 : index
    %45 = vector.load %arg8[%c0_19, %c381] : memref<8x1024xf32, #tpu.memory_space<vmem>>, vector<4x16xf32>
    tpu.vector_store %arg8[%c0_19, %c381], %44 {strides = array<i32>} : memref<8x1024xf32, #tpu.memory_space<vmem>>, vector<4x16xf32>,
    %46 = vector.extract_strided_slice %0 {offsets = [0, 0, 224], sizes = [1, 4, 16], strides = [1, 1, 1]} : vector<2x4x256xf32> to vector<1x4x16xf32>
    %47 = vector.shape_cast %46 : vector<1x4x16xf32> to vector<4x16xf32>
    %c0_20 = arith.constant 0 : index
    %c399 = arith.constant 399 : index
    %48 = vector.load %arg8[%c0_20, %c399] : memref<8x1024xf32, #tpu.memory_space<vmem>>, vector<4x16xf32>
    tpu.vector_store %arg8[%c0_20, %c399], %47 {strides = array<i32>} : memref<8x1024xf32, #tpu.memory_space<vmem>>, vector<4x16xf32>,
    %49 = vector.extract_strided_slice %0 {offsets = [0, 0, 240], sizes = [1, 4, 16], strides = [1, 1, 1]} : vector<2x4x256xf32> to vector<1x4x16xf32>
    %50 = vector.shape_cast %49 : vector<1x4x16xf32> to vector<4x16xf32>
    %c0_21 = arith.constant 0 : index
    %c417 = arith.constant 417 : index
    %51 = vector.load %arg8[%c0_21, %c417] : memref<8x1024xf32, #tpu.memory_space<vmem>>, vector<4x16xf32>
    tpu.vector_store %arg8[%c0_21, %c417], %50 {strides = array<i32>} : memref<8x1024xf32, #tpu.memory_space<vmem>>, vector<4x16xf32>,
    %52 = vector.extract_strided_slice %0 {offsets = [1, 0, 0], sizes = [1, 4, 16], strides = [1, 1, 1]} : vector<2x4x256xf32> to vector<1x4x16xf32>
    %53 = vector.shape_cast %52 : vector<1x4x16xf32> to vector<4x16xf32>
    %c0_22 = arith.constant 0 : index
    %c531 = arith.constant 531 : index
    %54 = vector.load %arg8[%c0_22, %c531] : memref<8x1024xf32, #tpu.memory_space<vmem>>, vector<4x16xf32>
    tpu.vector_store %arg8[%c0_22, %c531], %53 {strides = array<i32>} : memref<8x1024xf32, #tpu.memory_space<vmem>>, vector<4x16xf32>,
    %55 = vector.extract_strided_slice %0 {offsets = [1, 0, 16], sizes = [1, 4, 16], strides = [1, 1, 1]} : vector<2x4x256xf32> to vector<1x4x16xf32>
    %56 = vector.shape_cast %55 : vector<1x4x16xf32> to vector<4x16xf32>
    %c0_23 = arith.constant 0 : index
    %c549 = arith.constant 549 : index
    %57 = vector.load %arg8[%c0_23, %c549] : memref<8x1024xf32, #tpu.memory_space<vmem>>, vector<4x16xf32>
    tpu.vector_store %arg8[%c0_23, %c549], %56 {strides = array<i32>} : memref<8x1024xf32, #tpu.memory_space<vmem>>, vector<4x16xf32>,
    %58 = vector.extract_strided_slice %0 {offsets = [1, 0, 32], sizes = [1, 4, 16], strides = [1, 1, 1]} : vector<2x4x256xf32> to vector<1x4x16xf32>
    %59 = vector.shape_cast %58 : vector<1x4x16xf32> to vector<4x16xf32>
    %c0_24 = arith.constant 0 : index
    %c567 = arith.constant 567 : index
    %60 = vector.load %arg8[%c0_24, %c567] : memref<8x1024xf32, #tpu.memory_space<vmem>>, vector<4x16xf32>
    tpu.vector_store %arg8[%c0_24, %c567], %59 {strides = array<i32>} : memref<8x1024xf32, #tpu.memory_space<vmem>>, vector<4x16xf32>,
    %61 = vector.extract_strided_slice %0 {offsets = [1, 0, 48], sizes = [1, 4, 16], strides = [1, 1, 1]} : vector<2x4x256xf32> to vector<1x4x16xf32>
    %62 = vector.shape_cast %61 : vector<1x4x16xf32> to vector<4x16xf32>
    %c0_25 = arith.constant 0 : index
    %c585 = arith.constant 585 : index
    %63 = vector.load %arg8[%c0_25, %c585] : memref<8x1024xf32, #tpu.memory_space<vmem>>, vector<4x16xf32>
    tpu.vector_store %arg8[%c0_25, %c585], %62 {strides = array<i32>} : memref<8x1024xf32, #tpu.memory_space<vmem>>, vector<4x16xf32>,
    %64 = vector.extract_strided_slice %0 {offsets = [1, 0, 64], sizes = [1, 4, 16], strides = [1, 1, 1]} : vector<2x4x256xf32> to vector<1x4x16xf32>
    %65 = vector.shape_cast %64 : vector<1x4x16xf32> to vector<4x16xf32>
    %c0_26 = arith.constant 0 : index
    %c603 = arith.constant 603 : index
    %66 = vector.load %arg8[%c0_26, %c603] : memref<8x1024xf32, #tpu.memory_space<vmem>>, vector<4x16xf32>
    tpu.vector_store %arg8[%c0_26, %c603], %65 {strides = array<i32>} : memref<8x1024xf32, #tpu.memory_space<vmem>>, vector<4x16xf32>,
    %67 = vector.extract_strided_slice %0 {offsets = [1, 0, 80], sizes = [1, 4, 16], strides = [1, 1, 1]} : vector<2x4x256xf32> to vector<1x4x16xf32>
    %68 = vector.shape_cast %67 : vector<1x4x16xf32> to vector<4x16xf32>
    %c0_27 = arith.constant 0 : index
    %c621 = arith.constant 621 : index
    %69 = vector.load %arg8[%c0_27, %c621] : memref<8x1024xf32, #tpu.memory_space<vmem>>, vector<4x16xf32>
    tpu.vector_store %arg8[%c0_27, %c621], %68 {strides = array<i32>} : memref<8x1024xf32, #tpu.memory_space<vmem>>, vector<4x16xf32>,
    %70 = vector.extract_strided_slice %0 {offsets = [1, 0, 96], sizes = [1, 4, 16], strides = [1, 1, 1]} : vector<2x4x256xf32> to vector<1x4x16xf32>
    %71 = vector.shape_cast %70 : vector<1x4x16xf32> to vector<4x16xf32>
    %c0_28 = arith.constant 0 : index
    %c639 = arith.constant 639 : index
    %72 = vector.load %arg8[%c0_28, %c639] : memref<8x1024xf32, #tpu.memory_space<vmem>>, vector<4x16xf32>
    tpu.vector_store %arg8[%c0_28, %c639], %71 {strides = array<i32>} : memref<8x1024xf32, #tpu.memory_space<vmem>>, vector<4x16xf32>,
    %73 = vector.extract_strided_slice %0 {offsets = [1, 0, 112], sizes = [1, 4, 16], strides = [1, 1, 1]} : vector<2x4x256xf32> to vector<1x4x16xf32>
    %74 = vector.shape_cast %73 : vector<1x4x16xf32> to vector<4x16xf32>
    %c0_29 = arith.constant 0 : index
    %c657 = arith.constant 657 : index
    %75 = vector.load %arg8[%c0_29, %c657] : memref<8x1024xf32, #tpu.memory_space<vmem>>, vector<4x16xf32>
    tpu.vector_store %arg8[%c0_29, %c657], %74 {strides = array<i32>} : memref<8x1024xf32, #tpu.memory_space<vmem>>, vector<4x16xf32>,
    %76 = vector.extract_strided_slice %0 {offsets = [1, 0, 128], sizes = [1, 4, 16], strides = [1, 1, 1]} : vector<2x4x256xf32> to vector<1x4x16xf32>
    %77 = vector.shape_cast %76 : vector<1x4x16xf32> to vector<4x16xf32>
    %c0_30 = arith.constant 0 : index
    %c675 = arith.constant 675 : index
    %78 = vector.load %arg8[%c0_30, %c675] : memref<8x1024xf32, #tpu.memory_space<vmem>>, vector<4x16xf32>
    tpu.vector_store %arg8[%c0_30, %c675], %77 {strides = array<i32>} : memref<8x1024xf32, #tpu.memory_space<vmem>>, vector<4x16xf32>,
    %79 = vector.extract_strided_slice %0 {offsets = [1, 0, 144], sizes = [1, 4, 16], strides = [1, 1, 1]} : vector<2x4x256xf32> to vector<1x4x16xf32>
    %80 = vector.shape_cast %79 : vector<1x4x16xf32> to vector<4x16xf32>
    %c0_31 = arith.constant 0 : index
    %c693 = arith.constant 693 : index
    %81 = vector.load %arg8[%c0_31, %c693] : memref<8x1024xf32, #tpu.memory_space<vmem>>, vector<4x16xf32>
    tpu.vector_store %arg8[%c0_31, %c693], %80 {strides = array<i32>} : memref<8x1024xf32, #tpu.memory_space<vmem>>, vector<4x16xf32>,
    %82 = vector.extract_strided_slice %0 {offsets = [1, 0, 160], sizes = [1, 4, 16], strides = [1, 1, 1]} : vector<2x4x256xf32> to vector<1x4x16xf32>
    %83 = vector.shape_cast %82 : vector<1x4x16xf32> to vector<4x16xf32>
    %c0_32 = arith.constant 0 : index
    %c711 = arith.constant 711 : index
    %84 = vector.load %arg8[%c0_32, %c711] : memref<8x1024xf32, #tpu.memory_space<vmem>>, vector<4x16xf32>
    tpu.vector_store %arg8[%c0_32, %c711], %83 {strides = array<i32>} : memref<8x1024xf32, #tpu.memory_space<vmem>>, vector<4x16xf32>,
    %85 = vector.extract_strided_slice %0 {offsets = [1, 0, 176], sizes = [1, 4, 16], strides = [1, 1, 1]} : vector<2x4x256xf32> to vector<1x4x16xf32>
    %86 = vector.shape_cast %85 : vector<1x4x16xf32> to vector<4x16xf32>
    %c0_33 = arith.constant 0 : index
    %c729 = arith.constant 729 : index
    %87 = vector.load %arg8[%c0_33, %c729] : memref<8x1024xf32, #tpu.memory_space<vmem>>, vector<4x16xf32>
    tpu.vector_store %arg8[%c0_33, %c729], %86 {strides = array<i32>} : memref<8x1024xf32, #tpu.memory_space<vmem>>, vector<4x16xf32>,
    %88 = vector.extract_strided_slice %0 {offsets = [1, 0, 192], sizes = [1, 4, 16], strides = [1, 1, 1]} : vector<2x4x256xf32> to vector<1x4x16xf32>
    %89 = vector.shape_cast %88 : vector<1x4x16xf32> to vector<4x16xf32>
    %c0_34 = arith.constant 0 : index
    %c747 = arith.constant 747 : index
    %90 = vector.load %arg8[%c0_34, %c747] : memref<8x1024xf32, #tpu.memory_space<vmem>>, vector<4x16xf32>
    tpu.vector_store %arg8[%c0_34, %c747], %89 {strides = array<i32>} : memref<8x1024xf32, #tpu.memory_space<vmem>>, vector<4x16xf32>,
    %91 = vector.extract_strided_slice %0 {offsets = [1, 0, 208], sizes = [1, 4, 16], strides = [1, 1, 1]} : vector<2x4x256xf32> to vector<1x4x16xf32>
    %92 = vector.shape_cast %91 : vector<1x4x16xf32> to vector<4x16xf32>
    %c0_35 = arith.constant 0 : index
    %c765 = arith.constant 765 : index
    %93 = vector.load %arg8[%c0_35, %c765] : memref<8x1024xf32, #tpu.memory_space<vmem>>, vector<4x16xf32>
    tpu.vector_store %arg8[%c0_35, %c765], %92 {strides = array<i32>} : memref<8x1024xf32, #tpu.memory_space<vmem>>, vector<4x16xf32>,
    %94 = vector.extract_strided_slice %0 {offsets = [1, 0, 224], sizes = [1, 4, 16], strides = [1, 1, 1]} : vector<2x4x256xf32> to vector<1x4x16xf32>
    %95 = vector.shape_cast %94 : vector<1x4x16xf32> to vector<4x16xf32>
    %c0_36 = arith.constant 0 : index
    %c783 = arith.constant 783 : index
    %96 = vector.load %arg8[%c0_36, %c783] : memref<8x1024xf32, #tpu.memory_space<vmem>>, vector<4x16xf32>
    tpu.vector_store %arg8[%c0_36, %c783], %95 {strides = array<i32>} : memref<8x1024xf32, #tpu.memory_space<vmem>>, vector<4x16xf32>,
    %97 = vector.extract_strided_slice %0 {offsets = [1, 0, 240], sizes = [1, 4, 16], strides = [1, 1, 1]} : vector<2x4x256xf32> to vector<1x4x16xf32>
    %98 = vector.shape_cast %97 : vector<1x4x16xf32> to vector<4x16xf32>
    %c0_37 = arith.constant 0 : index
    %c801 = arith.constant 801 : index
    %99 = vector.load %arg8[%c0_37, %c801] : memref<8x1024xf32, #tpu.memory_space<vmem>>, vector<4x16xf32>
    tpu.vector_store %arg8[%c0_37, %c801], %98 {strides = array<i32>} : memref<8x1024xf32, #tpu.memory_space<vmem>>, vector<4x16xf32>,
    %c0_38 = arith.constant 0 : index
    %c0_39 = arith.constant 0 : index
    %100 = vector.load %arg3[%c0_38, %c0_39] : memref<8x72xf32, #tpu.memory_space<vmem>>, vector<8x72xf32>
    %c0_40 = arith.constant 0 : index
    %c109 = arith.constant 109 : index
    %101 = vector.load %arg8[%c0_40, %c109] : memref<8x1024xf32, #tpu.memory_space<vmem>>, vector<8x768xf32>
    %c0_41 = arith.constant 0 : index
    %c110 = arith.constant 110 : index
    %102 = vector.load %arg8[%c0_41, %c110] : memref<8x1024xf32, #tpu.memory_space<vmem>>, vector<8x768xf32>
    %c0_42 = arith.constant 0 : index
    %c111 = arith.constant 111 : index
    %103 = vector.load %arg8[%c0_42, %c111] : memref<8x1024xf32, #tpu.memory_space<vmem>>, vector<8x768xf32>
    %c0_43 = arith.constant 0 : index
    %c127 = arith.constant 127 : index
    %104 = vector.load %arg8[%c0_43, %c127] : memref<8x1024xf32, #tpu.memory_space<vmem>>, vector<8x768xf32>
    %c0_44 = arith.constant 0 : index
    %c128 = arith.constant 128 : index
    %105 = vector.load %arg8[%c0_44, %c128] : memref<8x1024xf32, #tpu.memory_space<vmem>>, vector<8x768xf32>
    %c0_45 = arith.constant 0 : index
    %c129 = arith.constant 129 : index
    %106 = vector.load %arg8[%c0_45, %c129] : memref<8x1024xf32, #tpu.memory_space<vmem>>, vector<8x768xf32>
    %c0_46 = arith.constant 0 : index
    %c145 = arith.constant 145 : index
    %107 = vector.load %arg8[%c0_46, %c145] : memref<8x1024xf32, #tpu.memory_space<vmem>>, vector<8x768xf32>
    %c0_47 = arith.constant 0 : index
    %c146 = arith.constant 146 : index
    %108 = vector.load %arg8[%c0_47, %c146] : memref<8x1024xf32, #tpu.memory_space<vmem>>, vector<8x768xf32>
    %c0_48 = arith.constant 0 : index
    %c147_49 = arith.constant 147 : index
    %109 = vector.load %arg8[%c0_48, %c147_49] : memref<8x1024xf32, #tpu.memory_space<vmem>>, vector<8x768xf32>
    %110 = tpu.concatenate %101, %102, %103, %104, %105, %106, %107, %108, %109 in 0 : vector<8x768xf32>, vector<8x768xf32>, vector<8x768xf32>, vector<8x768xf32>, vector<8x768xf32>, vector<8x768xf32>, vector<8x768xf32>, vector<8x768xf32>, vector<8x768xf32> -> vector<72x768xf32>
    %cst_50 = arith.constant dense<0.000000e+00> : vector<8x768xf32>
    %111 = tpu.matmul %100, %110, %cst_50 {dimension_numbers = #tpu.dot_dimension_numbers<[1], [0], [0], [1], [0, 0, 1, 1], [], []>} : vector<8x72xf32>, vector<72x768xf32>, vector<8x768xf32> -> vector<8x768xf32>
    %c0_51 = arith.constant 0 : index
    %c0_52 = arith.constant 0 : index
    %112 = vector.load %arg5[%c0_51, %c0_52] : memref<8x1xf32, #tpu.memory_space<vmem>>, vector<8x1xf32>
    %113 = vector.broadcast %112 : vector<8x1xf32> to vector<8x768xf32>
    %114 = arith.addf %111, %113 : vector<8x768xf32>
    %cst_53 = arith.constant 0.000000e+00 : f32
    %115 = vector.broadcast %cst_53 : f32 to vector<8x768xf32>
    %116 = arith.maximumf %114, %115 : vector<8x768xf32>
    %117 = vector.broadcast %1 : vector<1x768xf32> to vector<8x768xf32>
    %118 = arith.mulf %116, %117 : vector<8x768xf32>
    %c0_54 = arith.constant 0 : index
    %c128_55 = arith.constant 128 : index
    %119 = vector.load %arg8[%c0_54, %c128_55] : memref<8x1024xf32, #tpu.memory_space<vmem>>, vector<8x768xf32>
    tpu.vector_store %arg8[%c0_54, %c128_55], %118 {strides = array<i32>} : memref<8x1024xf32, #tpu.memory_space<vmem>>, vector<8x768xf32>,
    %c0_56 = arith.constant 0 : index
    %c0_57 = arith.constant 0 : index
    %120 = vector.load %arg4[%c0_56, %c0_57] : memref<4x72xf32, #tpu.memory_space<vmem>>, vector<4x72xf32>
    %c0_58 = arith.constant 0 : index
    %c109_59 = arith.constant 109 : index
    %121 = vector.load %arg8[%c0_58, %c109_59] : memref<8x1024xf32, #tpu.memory_space<vmem>>, vector<8x768xf32>
    %c0_60 = arith.constant 0 : index
    %c110_61 = arith.constant 110 : index
    %122 = vector.load %arg8[%c0_60, %c110_61] : memref<8x1024xf32, #tpu.memory_space<vmem>>, vector<8x768xf32>
    %c0_62 = arith.constant 0 : index
    %c111_63 = arith.constant 111 : index
    %123 = vector.load %arg8[%c0_62, %c111_63] : memref<8x1024xf32, #tpu.memory_space<vmem>>, vector<8x768xf32>
    %c0_64 = arith.constant 0 : index
    %c127_65 = arith.constant 127 : index
    %124 = vector.load %arg8[%c0_64, %c127_65] : memref<8x1024xf32, #tpu.memory_space<vmem>>, vector<8x768xf32>
    %c0_66 = arith.constant 0 : index
    %c128_67 = arith.constant 128 : index
    %125 = vector.load %arg8[%c0_66, %c128_67] : memref<8x1024xf32, #tpu.memory_space<vmem>>, vector<8x768xf32>
    %c0_68 = arith.constant 0 : index
    %c129_69 = arith.constant 129 : index
    %126 = vector.load %arg8[%c0_68, %c129_69] : memref<8x1024xf32, #tpu.memory_space<vmem>>, vector<8x768xf32>
    %c0_70 = arith.constant 0 : index
    %c145_71 = arith.constant 145 : index
    %127 = vector.load %arg8[%c0_70, %c145_71] : memref<8x1024xf32, #tpu.memory_space<vmem>>, vector<8x768xf32>
    %c0_72 = arith.constant 0 : index
    %c146_73 = arith.constant 146 : index
    %128 = vector.load %arg8[%c0_72, %c146_73] : memref<8x1024xf32, #tpu.memory_space<vmem>>, vector<8x768xf32>
    %c0_74 = arith.constant 0 : index
    %c147_75 = arith.constant 147 : index
    %129 = vector.load %arg8[%c0_74, %c147_75] : memref<8x1024xf32, #tpu.memory_space<vmem>>, vector<8x768xf32>
    %130 = tpu.concatenate %121, %122, %123, %124, %125, %126, %127, %128, %129 in 0 : vector<8x768xf32>, vector<8x768xf32>, vector<8x768xf32>, vector<8x768xf32>, vector<8x768xf32>, vector<8x768xf32>, vector<8x768xf32>, vector<8x768xf32>, vector<8x768xf32> -> vector<72x768xf32>
    %cst_76 = arith.constant dense<0.000000e+00> : vector<4x768xf32>
    %131 = tpu.matmul %120, %130, %cst_76 {dimension_numbers = #tpu.dot_dimension_numbers<[1], [0], [0], [1], [0, 0, 1, 1], [], []>} : vector<4x72xf32>, vector<72x768xf32>, vector<4x768xf32> -> vector<4x768xf32>
    %c0_77 = arith.constant 0 : index
    %c0_78 = arith.constant 0 : index
    %132 = vector.load %arg6[%c0_77, %c0_78] : memref<4x1xf32, #tpu.memory_space<vmem>>, vector<4x1xf32>
    %133 = vector.broadcast %132 : vector<4x1xf32> to vector<4x768xf32>
    %134 = arith.addf %131, %133 : vector<4x768xf32>
    %135 = vector.extract_strided_slice %134 {offsets = [0, 19], sizes = [4, 16], strides = [1, 1]} : vector<4x768xf32> to vector<4x16xf32>
    %136 = vector.extract_strided_slice %0 {offsets = [0, 0, 0], sizes = [1, 4, 16], strides = [1, 1, 1]} : vector<2x4x256xf32> to vector<1x4x16xf32>
    %137 = vector.shape_cast %136 : vector<1x4x16xf32> to vector<4x16xf32>
    %138 = arith.addf %135, %137 : vector<4x16xf32>
    %139 = vector.extract_strided_slice %134 {offsets = [0, 37], sizes = [4, 16], strides = [1, 1]} : vector<4x768xf32> to vector<4x16xf32>
    %140 = vector.extract_strided_slice %0 {offsets = [0, 0, 16], sizes = [1, 4, 16], strides = [1, 1, 1]} : vector<2x4x256xf32> to vector<1x4x16xf32>
    %141 = vector.shape_cast %140 : vector<1x4x16xf32> to vector<4x16xf32>
    %142 = arith.addf %139, %141 : vector<4x16xf32>
    %143 = vector.extract_strided_slice %134 {offsets = [0, 55], sizes = [4, 16], strides = [1, 1]} : vector<4x768xf32> to vector<4x16xf32>
    %144 = vector.extract_strided_slice %0 {offsets = [0, 0, 32], sizes = [1, 4, 16], strides = [1, 1, 1]} : vector<2x4x256xf32> to vector<1x4x16xf32>
    %145 = vector.shape_cast %144 : vector<1x4x16xf32> to vector<4x16xf32>
    %146 = arith.addf %143, %145 : vector<4x16xf32>
    %147 = vector.extract_strided_slice %134 {offsets = [0, 73], sizes = [4, 16], strides = [1, 1]} : vector<4x768xf32> to vector<4x16xf32>
    %148 = vector.extract_strided_slice %0 {offsets = [0, 0, 48], sizes = [1, 4, 16], strides = [1, 1, 1]} : vector<2x4x256xf32> to vector<1x4x16xf32>
    %149 = vector.shape_cast %148 : vector<1x4x16xf32> to vector<4x16xf32>
    %150 = arith.addf %147, %149 : vector<4x16xf32>
    %151 = vector.extract_strided_slice %134 {offsets = [0, 91], sizes = [4, 16], strides = [1, 1]} : vector<4x768xf32> to vector<4x16xf32>
    %152 = vector.extract_strided_slice %0 {offsets = [0, 0, 64], sizes = [1, 4, 16], strides = [1, 1, 1]} : vector<2x4x256xf32> to vector<1x4x16xf32>
    %153 = vector.shape_cast %152 : vector<1x4x16xf32> to vector<4x16xf32>
    %154 = arith.addf %151, %153 : vector<4x16xf32>
    %155 = vector.extract_strided_slice %134 {offsets = [0, 109], sizes = [4, 16], strides = [1, 1]} : vector<4x768xf32> to vector<4x16xf32>
    %156 = vector.extract_strided_slice %0 {offsets = [0, 0, 80], sizes = [1, 4, 16], strides = [1, 1, 1]} : vector<2x4x256xf32> to vector<1x4x16xf32>
    %157 = vector.shape_cast %156 : vector<1x4x16xf32> to vector<4x16xf32>
    %158 = arith.addf %155, %157 : vector<4x16xf32>
    %159 = vector.extract_strided_slice %134 {offsets = [0, 127], sizes = [4, 16], strides = [1, 1]} : vector<4x768xf32> to vector<4x16xf32>
    %160 = vector.extract_strided_slice %0 {offsets = [0, 0, 96], sizes = [1, 4, 16], strides = [1, 1, 1]} : vector<2x4x256xf32> to vector<1x4x16xf32>
    %161 = vector.shape_cast %160 : vector<1x4x16xf32> to vector<4x16xf32>
    %162 = arith.addf %159, %161 : vector<4x16xf32>
    %163 = vector.extract_strided_slice %134 {offsets = [0, 145], sizes = [4, 16], strides = [1, 1]} : vector<4x768xf32> to vector<4x16xf32>
    %164 = vector.extract_strided_slice %0 {offsets = [0, 0, 112], sizes = [1, 4, 16], strides = [1, 1, 1]} : vector<2x4x256xf32> to vector<1x4x16xf32>
    %165 = vector.shape_cast %164 : vector<1x4x16xf32> to vector<4x16xf32>
    %166 = arith.addf %163, %165 : vector<4x16xf32>
    %167 = vector.extract_strided_slice %134 {offsets = [0, 163], sizes = [4, 16], strides = [1, 1]} : vector<4x768xf32> to vector<4x16xf32>
    %168 = vector.extract_strided_slice %0 {offsets = [0, 0, 128], sizes = [1, 4, 16], strides = [1, 1, 1]} : vector<2x4x256xf32> to vector<1x4x16xf32>
    %169 = vector.shape_cast %168 : vector<1x4x16xf32> to vector<4x16xf32>
    %170 = arith.addf %167, %169 : vector<4x16xf32>
    %171 = vector.extract_strided_slice %134 {offsets = [0, 181], sizes = [4, 16], strides = [1, 1]} : vector<4x768xf32> to vector<4x16xf32>
    %172 = vector.extract_strided_slice %0 {offsets = [0, 0, 144], sizes = [1, 4, 16], strides = [1, 1, 1]} : vector<2x4x256xf32> to vector<1x4x16xf32>
    %173 = vector.shape_cast %172 : vector<1x4x16xf32> to vector<4x16xf32>
    %174 = arith.addf %171, %173 : vector<4x16xf32>
    %175 = vector.extract_strided_slice %134 {offsets = [0, 199], sizes = [4, 16], strides = [1, 1]} : vector<4x768xf32> to vector<4x16xf32>
    %176 = vector.extract_strided_slice %0 {offsets = [0, 0, 160], sizes = [1, 4, 16], strides = [1, 1, 1]} : vector<2x4x256xf32> to vector<1x4x16xf32>
    %177 = vector.shape_cast %176 : vector<1x4x16xf32> to vector<4x16xf32>
    %178 = arith.addf %175, %177 : vector<4x16xf32>
    %179 = vector.extract_strided_slice %134 {offsets = [0, 217], sizes = [4, 16], strides = [1, 1]} : vector<4x768xf32> to vector<4x16xf32>
    %180 = vector.extract_strided_slice %0 {offsets = [0, 0, 176], sizes = [1, 4, 16], strides = [1, 1, 1]} : vector<2x4x256xf32> to vector<1x4x16xf32>
    %181 = vector.shape_cast %180 : vector<1x4x16xf32> to vector<4x16xf32>
    %182 = arith.addf %179, %181 : vector<4x16xf32>
    %183 = vector.extract_strided_slice %134 {offsets = [0, 235], sizes = [4, 16], strides = [1, 1]} : vector<4x768xf32> to vector<4x16xf32>
    %184 = vector.extract_strided_slice %0 {offsets = [0, 0, 192], sizes = [1, 4, 16], strides = [1, 1, 1]} : vector<2x4x256xf32> to vector<1x4x16xf32>
    %185 = vector.shape_cast %184 : vector<1x4x16xf32> to vector<4x16xf32>
    %186 = arith.addf %183, %185 : vector<4x16xf32>
    %187 = vector.extract_strided_slice %134 {offsets = [0, 253], sizes = [4, 16], strides = [1, 1]} : vector<4x768xf32> to vector<4x16xf32>
    %188 = vector.extract_strided_slice %0 {offsets = [0, 0, 208], sizes = [1, 4, 16], strides = [1, 1, 1]} : vector<2x4x256xf32> to vector<1x4x16xf32>
    %189 = vector.shape_cast %188 : vector<1x4x16xf32> to vector<4x16xf32>
    %190 = arith.addf %187, %189 : vector<4x16xf32>
    %191 = vector.extract_strided_slice %134 {offsets = [0, 271], sizes = [4, 16], strides = [1, 1]} : vector<4x768xf32> to vector<4x16xf32>
    %192 = vector.extract_strided_slice %0 {offsets = [0, 0, 224], sizes = [1, 4, 16], strides = [1, 1, 1]} : vector<2x4x256xf32> to vector<1x4x16xf32>
    %193 = vector.shape_cast %192 : vector<1x4x16xf32> to vector<4x16xf32>
    %194 = arith.addf %191, %193 : vector<4x16xf32>
    %195 = vector.extract_strided_slice %134 {offsets = [0, 289], sizes = [4, 16], strides = [1, 1]} : vector<4x768xf32> to vector<4x16xf32>
    %196 = vector.extract_strided_slice %0 {offsets = [0, 0, 240], sizes = [1, 4, 16], strides = [1, 1, 1]} : vector<2x4x256xf32> to vector<1x4x16xf32>
    %197 = vector.shape_cast %196 : vector<1x4x16xf32> to vector<4x16xf32>
    %198 = arith.addf %195, %197 : vector<4x16xf32>
    %199 = tpu.concatenate %138, %142, %146, %150, %154, %158, %162, %166, %170, %174, %178, %182, %186, %190, %194, %198 in 1 : vector<4x16xf32>, vector<4x16xf32>, vector<4x16xf32>, vector<4x16xf32>, vector<4x16xf32>, vector<4x16xf32>, vector<4x16xf32>, vector<4x16xf32>, vector<4x16xf32>, vector<4x16xf32>, vector<4x16xf32>, vector<4x16xf32>, vector<4x16xf32>, vector<4x16xf32>, vector<4x16xf32>, vector<4x16xf32> -> vector<4x256xf32>
    %cst_79 = arith.constant 0.000000e+00 : f32
    %200 = vector.broadcast %cst_79 : f32 to vector<4x256xf32>
    %201 = arith.maximumf %199, %200 : vector<4x256xf32>
    %c0_80 = arith.constant 0 : index
    %c0_81 = arith.constant 0 : index
    %c0_82 = arith.constant 0 : index
    %202 = vector.load %arg7[%c0_80, %c0_81, %c0_82] : memref<2x4x256xf32, #tpu.memory_space<vmem>>, vector<1x4x256xf32>
    %203 = vector.shape_cast %202 : vector<1x4x256xf32> to vector<4x256xf32>
    %204 = vector.shape_cast %201 : vector<4x256xf32> to vector<1x4x256xf32>
    tpu.vector_store %arg7[%c0_80, %c0_81, %c0_82], %204 {strides = array<i32>} : memref<2x4x256xf32, #tpu.memory_space<vmem>>, vector<1x4x256xf32>,
    %205 = vector.extract_strided_slice %134 {offsets = [0, 403], sizes = [4, 16], strides = [1, 1]} : vector<4x768xf32> to vector<4x16xf32>
    %206 = vector.extract_strided_slice %0 {offsets = [1, 0, 0], sizes = [1, 4, 16], strides = [1, 1, 1]} : vector<2x4x256xf32> to vector<1x4x16xf32>
    %207 = vector.shape_cast %206 : vector<1x4x16xf32> to vector<4x16xf32>
    %208 = arith.addf %205, %207 : vector<4x16xf32>
    %209 = vector.extract_strided_slice %134 {offsets = [0, 421], sizes = [4, 16], strides = [1, 1]} : vector<4x768xf32> to vector<4x16xf32>
    %210 = vector.extract_strided_slice %0 {offsets = [1, 0, 16], sizes = [1, 4, 16], strides = [1, 1, 1]} : vector<2x4x256xf32> to vector<1x4x16xf32>
    %211 = vector.shape_cast %210 : vector<1x4x16xf32> to vector<4x16xf32>
    %212 = arith.addf %209, %211 : vector<4x16xf32>
    %213 = vector.extract_strided_slice %134 {offsets = [0, 439], sizes = [4, 16], strides = [1, 1]} : vector<4x768xf32> to vector<4x16xf32>
    %214 = vector.extract_strided_slice %0 {offsets = [1, 0, 32], sizes = [1, 4, 16], strides = [1, 1, 1]} : vector<2x4x256xf32> to vector<1x4x16xf32>
    %215 = vector.shape_cast %214 : vector<1x4x16xf32> to vector<4x16xf32>
    %216 = arith.addf %213, %215 : vector<4x16xf32>
    %217 = vector.extract_strided_slice %134 {offsets = [0, 457], sizes = [4, 16], strides = [1, 1]} : vector<4x768xf32> to vector<4x16xf32>
    %218 = vector.extract_strided_slice %0 {offsets = [1, 0, 48], sizes = [1, 4, 16], strides = [1, 1, 1]} : vector<2x4x256xf32> to vector<1x4x16xf32>
    %219 = vector.shape_cast %218 : vector<1x4x16xf32> to vector<4x16xf32>
    %220 = arith.addf %217, %219 : vector<4x16xf32>
    %221 = vector.extract_strided_slice %134 {offsets = [0, 475], sizes = [4, 16], strides = [1, 1]} : vector<4x768xf32> to vector<4x16xf32>
    %222 = vector.extract_strided_slice %0 {offsets = [1, 0, 64], sizes = [1, 4, 16], strides = [1, 1, 1]} : vector<2x4x256xf32> to vector<1x4x16xf32>
    %223 = vector.shape_cast %222 : vector<1x4x16xf32> to vector<4x16xf32>
    %224 = arith.addf %221, %223 : vector<4x16xf32>
    %225 = vector.extract_strided_slice %134 {offsets = [0, 493], sizes = [4, 16], strides = [1, 1]} : vector<4x768xf32> to vector<4x16xf32>
    %226 = vector.extract_strided_slice %0 {offsets = [1, 0, 80], sizes = [1, 4, 16], strides = [1, 1, 1]} : vector<2x4x256xf32> to vector<1x4x16xf32>
    %227 = vector.shape_cast %226 : vector<1x4x16xf32> to vector<4x16xf32>
    %228 = arith.addf %225, %227 : vector<4x16xf32>
    %229 = vector.extract_strided_slice %134 {offsets = [0, 511], sizes = [4, 16], strides = [1, 1]} : vector<4x768xf32> to vector<4x16xf32>
    %230 = vector.extract_strided_slice %0 {offsets = [1, 0, 96], sizes = [1, 4, 16], strides = [1, 1, 1]} : vector<2x4x256xf32> to vector<1x4x16xf32>
    %231 = vector.shape_cast %230 : vector<1x4x16xf32> to vector<4x16xf32>
    %232 = arith.addf %229, %231 : vector<4x16xf32>
    %233 = vector.extract_strided_slice %134 {offsets = [0, 529], sizes = [4, 16], strides = [1, 1]} : vector<4x768xf32> to vector<4x16xf32>
    %234 = vector.extract_strided_slice %0 {offsets = [1, 0, 112], sizes = [1, 4, 16], strides = [1, 1, 1]} : vector<2x4x256xf32> to vector<1x4x16xf32>
    %235 = vector.shape_cast %234 : vector<1x4x16xf32> to vector<4x16xf32>
    %236 = arith.addf %233, %235 : vector<4x16xf32>
    %237 = vector.extract_strided_slice %134 {offsets = [0, 547], sizes = [4, 16], strides = [1, 1]} : vector<4x768xf32> to vector<4x16xf32>
    %238 = vector.extract_strided_slice %0 {offsets = [1, 0, 128], sizes = [1, 4, 16], strides = [1, 1, 1]} : vector<2x4x256xf32> to vector<1x4x16xf32>
    %239 = vector.shape_cast %238 : vector<1x4x16xf32> to vector<4x16xf32>
    %240 = arith.addf %237, %239 : vector<4x16xf32>
    %241 = vector.extract_strided_slice %134 {offsets = [0, 565], sizes = [4, 16], strides = [1, 1]} : vector<4x768xf32> to vector<4x16xf32>
    %242 = vector.extract_strided_slice %0 {offsets = [1, 0, 144], sizes = [1, 4, 16], strides = [1, 1, 1]} : vector<2x4x256xf32> to vector<1x4x16xf32>
    %243 = vector.shape_cast %242 : vector<1x4x16xf32> to vector<4x16xf32>
    %244 = arith.addf %241, %243 : vector<4x16xf32>
    %245 = vector.extract_strided_slice %134 {offsets = [0, 583], sizes = [4, 16], strides = [1, 1]} : vector<4x768xf32> to vector<4x16xf32>
    %246 = vector.extract_strided_slice %0 {offsets = [1, 0, 160], sizes = [1, 4, 16], strides = [1, 1, 1]} : vector<2x4x256xf32> to vector<1x4x16xf32>
    %247 = vector.shape_cast %246 : vector<1x4x16xf32> to vector<4x16xf32>
    %248 = arith.addf %245, %247 : vector<4x16xf32>
    %249 = vector.extract_strided_slice %134 {offsets = [0, 601], sizes = [4, 16], strides = [1, 1]} : vector<4x768xf32> to vector<4x16xf32>
    %250 = vector.extract_strided_slice %0 {offsets = [1, 0, 176], sizes = [1, 4, 16], strides = [1, 1, 1]} : vector<2x4x256xf32> to vector<1x4x16xf32>
    %251 = vector.shape_cast %250 : vector<1x4x16xf32> to vector<4x16xf32>
    %252 = arith.addf %249, %251 : vector<4x16xf32>
    %253 = vector.extract_strided_slice %134 {offsets = [0, 619], sizes = [4, 16], strides = [1, 1]} : vector<4x768xf32> to vector<4x16xf32>
    %254 = vector.extract_strided_slice %0 {offsets = [1, 0, 192], sizes = [1, 4, 16], strides = [1, 1, 1]} : vector<2x4x256xf32> to vector<1x4x16xf32>
    %255 = vector.shape_cast %254 : vector<1x4x16xf32> to vector<4x16xf32>
    %256 = arith.addf %253, %255 : vector<4x16xf32>
    %257 = vector.extract_strided_slice %134 {offsets = [0, 637], sizes = [4, 16], strides = [1, 1]} : vector<4x768xf32> to vector<4x16xf32>
    %258 = vector.extract_strided_slice %0 {offsets = [1, 0, 208], sizes = [1, 4, 16], strides = [1, 1, 1]} : vector<2x4x256xf32> to vector<1x4x16xf32>
    %259 = vector.shape_cast %258 : vector<1x4x16xf32> to vector<4x16xf32>
    %260 = arith.addf %257, %259 : vector<4x16xf32>
    %261 = vector.extract_strided_slice %134 {offsets = [0, 655], sizes = [4, 16], strides = [1, 1]} : vector<4x768xf32> to vector<4x16xf32>
    %262 = vector.extract_strided_slice %0 {offsets = [1, 0, 224], sizes = [1, 4, 16], strides = [1, 1, 1]} : vector<2x4x256xf32> to vector<1x4x16xf32>
    %263 = vector.shape_cast %262 : vector<1x4x16xf32> to vector<4x16xf32>
    %264 = arith.addf %261, %263 : vector<4x16xf32>
    %265 = vector.extract_strided_slice %134 {offsets = [0, 673], sizes = [4, 16], strides = [1, 1]} : vector<4x768xf32> to vector<4x16xf32>
    %266 = vector.extract_strided_slice %0 {offsets = [1, 0, 240], sizes = [1, 4, 16], strides = [1, 1, 1]} : vector<2x4x256xf32> to vector<1x4x16xf32>
    %267 = vector.shape_cast %266 : vector<1x4x16xf32> to vector<4x16xf32>
    %268 = arith.addf %265, %267 : vector<4x16xf32>
    %269 = tpu.concatenate %208, %212, %216, %220, %224, %228, %232, %236, %240, %244, %248, %252, %256, %260, %264, %268 in 1 : vector<4x16xf32>, vector<4x16xf32>, vector<4x16xf32>, vector<4x16xf32>, vector<4x16xf32>, vector<4x16xf32>, vector<4x16xf32>, vector<4x16xf32>, vector<4x16xf32>, vector<4x16xf32>, vector<4x16xf32>, vector<4x16xf32>, vector<4x16xf32>, vector<4x16xf32>, vector<4x16xf32>, vector<4x16xf32> -> vector<4x256xf32>
    %cst_83 = arith.constant 0.000000e+00 : f32
    %270 = vector.broadcast %cst_83 : f32 to vector<4x256xf32>
    %271 = arith.maximumf %269, %270 : vector<4x256xf32>
    %c1 = arith.constant 1 : index
    %c0_84 = arith.constant 0 : index
    %c0_85 = arith.constant 0 : index
    %272 = vector.load %arg7[%c1, %c0_84, %c0_85] : memref<2x4x256xf32, #tpu.memory_space<vmem>>, vector<1x4x256xf32>
    %273 = vector.shape_cast %272 : vector<1x4x256xf32> to vector<4x256xf32>
    %274 = vector.shape_cast %271 : vector<4x256xf32> to vector<1x4x256xf32>
    tpu.vector_store %arg7[%c1, %c0_84, %c0_85], %274 {strides = array<i32>} : memref<2x4x256xf32, #tpu.memory_space<vmem>>, vector<1x4x256xf32>,
    return
  }
  func.func @transform_0(%arg0: i32) -> (i32, i32, i32) {
    %c0_i32 = arith.constant 0 : i32
    %c0_i32_0 = arith.constant 0 : i32
    %c0_i32_1 = arith.constant 0 : i32
    %c0_i32_2 = arith.constant 0 : i32
    return %c0_i32, %c0_i32_0, %c0_i32_1 : i32, i32, i32
  }
  func.func @transform_1(%arg0: i32) -> (i32, i32) {
    %c0_i32 = arith.constant 0 : i32
    %c0_i32_0 = arith.constant 0 : i32
    %c0_i32_1 = arith.constant 0 : i32
    return %c0_i32, %c0_i32_0 : i32, i32
  }
  func.func @transform_2(%arg0: i32) -> (i32, i32) {
    %c0_i32 = arith.constant 0 : i32
    %c0_i32_0 = arith.constant 0 : i32
    %c0_i32_1 = arith.constant 0 : i32
    return %c0_i32, %c0_i32_0 : i32, i32
  }
  func.func @transform_3(%arg0: i32) -> (i32, i32) {
    %c0_i32 = arith.constant 0 : i32
    %c0_i32_0 = arith.constant 0 : i32
    %c0_i32_1 = arith.constant 0 : i32
    return %c0_i32, %c0_i32_0 : i32, i32
  }
  func.func @transform_4(%arg0: i32) -> (i32, i32) {
    %c0_i32 = arith.constant 0 : i32
    %c0_i32_0 = arith.constant 0 : i32
    %c0_i32_1 = arith.constant 0 : i32
    return %c0_i32, %c0_i32_0 : i32, i32
  }
  func.func @transform_5(%arg0: i32) -> (i32, i32) {
    %c0_i32 = arith.constant 0 : i32
    %c0_i32_0 = arith.constant 0 : i32
    %c0_i32_1 = arith.constant 0 : i32
    return %c0_i32, %c0_i32_0 : i32, i32
  }
  func.func @transform_6(%arg0: i32) -> (i32, i32, i32) {
    %c0_i32 = arith.constant 0 : i32
    %c0_i32_0 = arith.constant 0 : i32
    %c0_i32_1 = arith.constant 0 : i32
    %c0_i32_2 = arith.constant 0 : i32
    return %c0_i32, %c0_i32_0, %c0_i32_1 : i32, i32, i32
  }
}

</mosaic_0001>

<llo_original>
// kernel: resbl_forward.1
$region0: #{resbl_forward.1}
  #allocation0 [shape = 'u32[]', space=smem, size = 0x4, offset = 0x4, fixed_abs, tag = 'smem constant byte address 0x4 - core index']
  #allocation1 [shape = 'u32[72,128]{1,0:T(1,128)}', space=vmem, size = 0x9000, scoped, tag = 'internal scratch']
  #allocation2 [shape = 'f32[8,1024]{1,0:T(8,128)}', space=vmem, size = 0x8000, scoped, tag = 'scratch operand']
  %s0 = inlined_call_operand.vmem [shape: f32[2,4,256], index: 0, kind: input, shape index: {}]
  %s1 = inlined_call_operand.vmem [shape: f32[1,768], index: 1, kind: input, shape index: {}]
  %s2 = inlined_call_operand.vmem [shape: f32[8,72], index: 2, kind: input, shape index: {}]
  %s3 = inlined_call_operand.vmem [shape: f32[4,72], index: 3, kind: input, shape index: {}]
  %s4 = inlined_call_operand.vmem [shape: f32[8,1], index: 4, kind: input, shape index: {}]
  %s5 = inlined_call_operand.vmem [shape: f32[4,1], index: 5, kind: input, shape index: {}]
  %s6 = inlined_call_operand.vmem [shape: f32[2,4,256], index: 6, kind: output, shape index: {}]
  %s7 = sld [smem:[#allocation0]]
  $region34: #{resbl_forward.1} parent=0
    _
  %s9 = ssub.s32 1, %s7
  %s10 = scalar_select 0, %s9, %s7
  // Predicated region
  $region2: #{resbl_forward.1} parent=0 // pred_check
    _
  $region3: #{resbl_forward.1} parent=0 // pred_check_branch
    %12 = sbr.rel (0) target = $region5
  $region4: #{resbl_forward.1} parent=0 // pred_region
    _
  $region5: #{resbl_forward.1} parent=0 // pred_fallthru
    _
  // Predicated region
  $region6: #{resbl_forward.1} parent=0 // pred_check
    _
  $region7: #{resbl_forward.1} parent=0 // pred_check_branch
    %14 = sbr.rel (0) target = $region9
  $region8: #{resbl_forward.1} parent=0 // pred_region
    _
  $region9: #{resbl_forward.1} parent=0 // pred_fallthru
    _
  // Predicated region
  $region10: #{resbl_forward.1} parent=0 // pred_check
    _
  $region11: #{resbl_forward.1} parent=0 // pred_check_branch
    %16 = sbr.rel (0) target = $region13
  $region12: #{resbl_forward.1} parent=0 // pred_region
    _
  $region13: #{resbl_forward.1} parent=0 // pred_fallthru
    _
  // Predicated region
  $region14: #{resbl_forward.1} parent=0 // pred_check
    _
  $region15: #{resbl_forward.1} parent=0 // pred_check_branch
    %18 = sbr.rel (0) target = $region17
  $region16: #{resbl_forward.1} parent=0 // pred_region
    _
  $region17: #{resbl_forward.1} parent=0 // pred_fallthru
    _
  // Predicated region
  $region18: #{resbl_forward.1} parent=0 // pred_check
    _
  $region19: #{resbl_forward.1} parent=0 // pred_check_branch
    %20 = sbr.rel (0) target = $region21
  $region20: #{resbl_forward.1} parent=0 // pred_region
    _
  $region21: #{resbl_forward.1} parent=0 // pred_fallthru
    _
  // Predicated region
  $region22: #{resbl_forward.1} parent=0 // pred_check
    _
  $region23: #{resbl_forward.1} parent=0 // pred_check_branch
    %22 = sbr.rel (0) target = $region25
  $region24: #{resbl_forward.1} parent=0 // pred_region
    _
  $region25: #{resbl_forward.1} parent=0 // pred_fallthru
    _
  %v23 = vld [vmem:[%s0] sm:$0xff]
  %v24 = vld [vmem:[%s0 + $0x8] sm:$0xff]
  %v25 = vld [vmem:[%s1] sm:$0x3f]
  %26 = vst [vmem:[#allocation2] sm:$0xff] 0.0
  %27 = vst [vmem:[#allocation2 + $0x8] sm:$0xff] 0.0
  %28 = vst [vmem:[#allocation2 + $0x10] sm:$0xff] 0.0
  %29 = vst [vmem:[#allocation2 + $0x18] sm:$0xff] 0.0
  %30 = vst [vmem:[#allocation2 + $0x20] sm:$0xff] 0.0
  %31 = vst [vmem:[#allocation2 + $0x28] sm:$0xff] 0.0
  %32 = vst [vmem:[#allocation2 + $0x30] sm:$0xff] 0.0
  %33 = vst [vmem:[#allocation2 + $0x38] sm:$0xff] 0.0
  %35 = vst [vmem:[#allocation1] ss:$2 sm:$0xff] %v23
  %v36 = vld.sshfl [vmem:[#allocation1] sm:$0xff pattern:$0x75316420]
  %37 = vrot.lane.b32.xlu0 %v36, 19
  %v38 = vpop.permute.xlu0 %37
  %vm40 = vcmask 281752
  %41 = vst.msk [vmem:[#allocation2 + $0x8] sm:$0xf] %vm40, %v38
  %42 = vst [vmem:[#allocation1] ss:$2 sm:$0xff] %v23
  %v43 = vld.sshfl [vmem:[#allocation1] sm:$0xff pattern:$0x75316420]
  %44 = vrot.lane.b32.xlu0 %v43, 21
  %v45 = vpop.permute.xlu0 %44
  %vm47 = vcmask 429352
  %48 = vst.msk [vmem:[#allocation2 + $0x8] sm:$0xf] %vm47, %v45
  %49 = vst [vmem:[#allocation1] ss:$2 sm:$0xff] %v23
  %v50 = vld.sshfl [vmem:[#allocation1] sm:$0xff pattern:$0x75316420]
  %51 = vrot.lane.b32.xlu0 %v50, 23
  %v52 = vpop.permute.xlu0 %51
  %vm54 = vcmask 576952
  %55 = vst.msk [vmem:[#allocation2 + $0x8] sm:$0xf] %vm54, %v52
  %56 = vst [vmem:[#allocation1] ss:$2 sm:$0xff] %v23
  %v57 = vld.sshfl [vmem:[#allocation1] sm:$0xff pattern:$0x75316420]
  %58 = vrot.lane.b32.xlu0 %v57, 25
  %v59 = vpop.permute.xlu0 %58
  %vm61 = vcmask 724552
  %62 = vst.msk [vmem:[#allocation2 + $0x8] sm:$0xf] %vm61, %v59
  %63 = vst [vmem:[#allocation1] ss:$2 sm:$0xff] %v23
  %v64 = vld.sshfl [vmem:[#allocation1] sm:$0xff pattern:$0x75316420]
  %65 = vrot.lane.b32.xlu0 %v64, 27
  %v66 = vpop.permute.xlu0 %65
  %vm68 = vcmask 872152
  %69 = vst.msk [vmem:[#allocation2 + $0x8] sm:$0xf] %vm68, %v66
  %70 = vst [vmem:[#allocation1] ss:$2 sm:$0xff] %v23
  %v71 = vld.sshfl [vmem:[#allocation1] sm:$0xff pattern:$0x75316420]
  %72 = vrot.lane.b32.xlu0 %v71, 29
  %v73 = vpop.permute.xlu0 %72
  %vm75 = vcmask 1019752
  %76 = vst.msk [vmem:[#allocation2 + $0x8] sm:$0xf] %vm75, %v73
  %77 = vst [vmem:[#allocation1] ss:$2 sm:$0xff] %v23
  %v78 = vld.sshfl [vmem:[#allocation1] sm:$0xff pattern:$0x75316420]
  %79 = vrot.lane.b32.xlu0 %v78, 31
  %v80 = vpop.permute.xlu0 %79
  %vm82 = vcmask 1044472
  %83 = vst.msk [vmem:[#allocation2 + $0x8] sm:$0xf] %vm82, %v80
  %vm84 = vcmask 117760
  %85 = vst.msk [vmem:[#allocation2 + $0x10] sm:$0xf] %vm84, %v80
  %86 = vst [vmem:[#allocation1] ss:$2 sm:$0xff] %v23
  %v87 = vld.sshfl [vmem:[#allocation1] sm:$0xff pattern:$0x75316420]
  %88 = vrot.lane.b32.xlu0 %v87, 33
  %v89 = vpop.permute.xlu0 %88
  %vm91 = vcmask 265352
  %92 = vst.msk [vmem:[#allocation2 + $0x10] sm:$0xf] %vm91, %v89
  %v93 = vrot.slane %v23, 4
  %94 = vst [vmem:[#allocation1] ss:$2 sm:$0xff] %v93
  %v95 = vld.sshfl [vmem:[#allocation1] sm:$0xff pattern:$0x75316420]
  %96 = vrot.lane.b32.xlu0 %v95, 35
  %v97 = vpop.permute.xlu0 %96
  %vm99 = vcmask 412952
  %100 = vst.msk [vmem:[#allocation2 + $0x10] sm:$0xf] %vm99, %v97
  %101 = vrot.lane.b32.xlu0 %v23, 112
  %v102 = vpop.permute.xlu0 %101
  %v103 = vrot.slane %v102, 4
  %104 = vst [vmem:[#allocation1] ss:$2 sm:$0xff] %v103
  %v105 = vld.sshfl [vmem:[#allocation1] sm:$0xff pattern:$0x75316420]
  %106 = vrot.lane.b32.xlu0 %v105, 53
  %v107 = vpop.permute.xlu0 %106
  %vm109 = vcmask 560552
  %110 = vst.msk [vmem:[#allocation2 + $0x10] sm:$0xf] %vm109, %v107
  %111 = vrot.lane.b32.xlu0 %v23, 96
  %v112 = vpop.permute.xlu0 %111
  %v113 = vrot.slane %v112, 4
  %114 = vst [vmem:[#allocation1] ss:$2 sm:$0xff] %v113
  %v115 = vld.sshfl [vmem:[#allocation1] sm:$0xff pattern:$0x75316420]
  %116 = vrot.lane.b32.xlu0 %v115, 71
  %v117 = vpop.permute.xlu0 %116
  %vm119 = vcmask 708152
  %120 = vst.msk [vmem:[#allocation2 + $0x10] sm:$0xf] %vm119, %v117
  %121 = vrot.lane.b32.xlu0 %v23, 80
  %v122 = vpop.permute.xlu0 %121
  %v123 = vrot.slane %v122, 4
  %124 = vst [vmem:[#allocation1] ss:$2 sm:$0xff] %v123
  %v125 = vld.sshfl [vmem:[#allocation1] sm:$0xff pattern:$0x75316420]
  %126 = vrot.lane.b32.xlu0 %v125, 89
  %v127 = vpop.permute.xlu0 %126
  %vm129 = vcmask 855752
  %130 = vst.msk [vmem:[#allocation2 + $0x10] sm:$0xf] %vm129, %v127
  %131 = vrot.lane.b32.xlu0 %v23, 64
  %v132 = vpop.permute.xlu0 %131
  %v133 = vrot.slane %v132, 4
  %134 = vst [vmem:[#allocation1] ss:$2 sm:$0xff] %v133
  %v135 = vld.sshfl [vmem:[#allocation1] sm:$0xff pattern:$0x75316420]
  %136 = vrot.lane.b32.xlu0 %v135, 107
  %v137 = vpop.permute.xlu0 %136
  %vm139 = vcmask 1003352
  %140 = vst.msk [vmem:[#allocation2 + $0x10] sm:$0xf] %vm139, %v137
  %141 = vrot.lane.b32.xlu0 %v23, 48
  %v142 = vpop.permute.xlu0 %141
  %v143 = vrot.slane %v142, 4
  %144 = vst [vmem:[#allocation1] ss:$2 sm:$0xff] %v143
  %v145 = vld.sshfl [vmem:[#allocation1] sm:$0xff pattern:$0x75316420]
  %146 = vrot.lane.b32.xlu0 %v145, 125
  %v147 = vpop.permute.xlu0 %146
  %vm149 = vcmask 1044456
  %150 = vst.msk [vmem:[#allocation2 + $0x10] sm:$0xf] %vm149, %v147
  %vm151 = vcmask 101376
  %152 = vst.msk [vmem:[#allocation2 + $0x18] sm:$0xf] %vm151, %v147
  %153 = vrot.lane.b32.xlu0 %v23, 32
  %v154 = vpop.permute.xlu0 %153
  %v155 = vrot.slane %v154, 4
  %156 = vst [vmem:[#allocation1] ss:$2 sm:$0xff] %v155
  %v157 = vld.sshfl [vmem:[#allocation1] sm:$0xff pattern:$0x75316420]
  %158 = vrot.lane.b32.xlu0 %v157, 15
  %v159 = vpop.permute.xlu0 %158
  %vm161 = vcmask 248952
  %162 = vst.msk [vmem:[#allocation2 + $0x18] sm:$0xf] %vm161, %v159
  %163 = vrot.lane.b32.xlu0 %v23, 16
  %v164 = vpop.permute.xlu0 %163
  %v165 = vrot.slane %v164, 4
  %166 = vst [vmem:[#allocation1] ss:$2 sm:$0xff] %v165
  %v167 = vld.sshfl [vmem:[#allocation1] sm:$0xff pattern:$0x75316420]
  %168 = vrot.lane.b32.xlu0 %v167, 33
  %v169 = vpop.permute.xlu0 %168
  %vm171 = vcmask 396552
  %172 = vst.msk [vmem:[#allocation2 + $0x18] sm:$0xf] %vm171, %v169
  %174 = vst [vmem:[#allocation1] ss:$2 sm:$0xff] %v24
  %v175 = vld.sshfl [vmem:[#allocation1] sm:$0xff pattern:$0x75316420]
  %176 = vrot.lane.b32.xlu0 %v175, 19
  %v177 = vpop.permute.xlu0 %176
  %179 = vst.msk [vmem:[#allocation2 + $0x20] sm:$0xf] %vm40, %v177
  %180 = vst [vmem:[#allocation1] ss:$2 sm:$0xff] %v24
  %v181 = vld.sshfl [vmem:[#allocation1] sm:$0xff pattern:$0x75316420]
  %182 = vrot.lane.b32.xlu0 %v181, 21
  %v183 = vpop.permute.xlu0 %182
  %185 = vst.msk [vmem:[#allocation2 + $0x20] sm:$0xf] %vm47, %v183
  %186 = vst [vmem:[#allocation1] ss:$2 sm:$0xff] %v24
  %v187 = vld.sshfl [vmem:[#allocation1] sm:$0xff pattern:$0x75316420]
  %188 = vrot.lane.b32.xlu0 %v187, 23
  %v189 = vpop.permute.xlu0 %188
  %191 = vst.msk [vmem:[#allocation2 + $0x20] sm:$0xf] %vm54, %v189
  %192 = vst [vmem:[#allocation1] ss:$2 sm:$0xff] %v24
  %v193 = vld.sshfl [vmem:[#allocation1] sm:$0xff pattern:$0x75316420]
  %194 = vrot.lane.b32.xlu0 %v193, 25
  %v195 = vpop.permute.xlu0 %194
  %197 = vst.msk [vmem:[#allocation2 + $0x20] sm:$0xf] %vm61, %v195
  %198 = vst [vmem:[#allocation1] ss:$2 sm:$0xff] %v24
  %v199 = vld.sshfl [vmem:[#allocation1] sm:$0xff pattern:$0x75316420]
  %200 = vrot.lane.b32.xlu0 %v199, 27
  %v201 = vpop.permute.xlu0 %200
  %203 = vst.msk [vmem:[#allocation2 + $0x20] sm:$0xf] %vm68, %v201
  %204 = vst [vmem:[#allocation1] ss:$2 sm:$0xff] %v24
  %v205 = vld.sshfl [vmem:[#allocation1] sm:$0xff pattern:$0x75316420]
  %206 = vrot.lane.b32.xlu0 %v205, 29
  %v207 = vpop.permute.xlu0 %206
  %209 = vst.msk [vmem:[#allocation2 + $0x20] sm:$0xf] %vm75, %v207
  %210 = vst [vmem:[#allocation1] ss:$2 sm:$0xff] %v24
  %v211 = vld.sshfl [vmem:[#allocation1] sm:$0xff pattern:$0x75316420]
  %212 = vrot.lane.b32.xlu0 %v211, 31
  %v213 = vpop.permute.xlu0 %212
  %215 = vst.msk [vmem:[#allocation2 + $0x20] sm:$0xf] %vm82, %v213
  %216 = vst.msk [vmem:[#allocation2 + $0x28] sm:$0xf] %vm84, %v213
  %217 = vst [vmem:[#allocation1] ss:$2 sm:$0xff] %v24
  %v218 = vld.sshfl [vmem:[#allocation1] sm:$0xff pattern:$0x75316420]
  %219 = vrot.lane.b32.xlu0 %v218, 33
  %v220 = vpop.permute.xlu0 %219
  %222 = vst.msk [vmem:[#allocation2 + $0x28] sm:$0xf] %vm91, %v220
  %v223 = vrot.slane %v24, 4
  %224 = vst [vmem:[#allocation1] ss:$2 sm:$0xff] %v223
  %v225 = vld.sshfl [vmem:[#allocation1] sm:$0xff pattern:$0x75316420]
  %226 = vrot.lane.b32.xlu0 %v225, 35
  %v227 = vpop.permute.xlu0 %226
  %229 = vst.msk [vmem:[#allocation2 + $0x28] sm:$0xf] %vm99, %v227
  %230 = vrot.lane.b32.xlu0 %v24, 112
  %v231 = vpop.permute.xlu0 %230
  %v232 = vrot.slane %v231, 4
  %233 = vst [vmem:[#allocation1] ss:$2 sm:$0xff] %v232
  %v234 = vld.sshfl [vmem:[#allocation1] sm:$0xff pattern:$0x75316420]
  %235 = vrot.lane.b32.xlu0 %v234, 53
  %v236 = vpop.permute.xlu0 %235
  %238 = vst.msk [vmem:[#allocation2 + $0x28] sm:$0xf] %vm109, %v236
  %239 = vrot.lane.b32.xlu0 %v24, 96
  %v240 = vpop.permute.xlu0 %239
  %v241 = vrot.slane %v240, 4
  %242 = vst [vmem:[#allocation1] ss:$2 sm:$0xff] %v241
  %v243 = vld.sshfl [vmem:[#allocation1] sm:$0xff pattern:$0x75316420]
  %244 = vrot.lane.b32.xlu0 %v243, 71
  %v245 = vpop.permute.xlu0 %244
  %247 = vst.msk [vmem:[#allocation2 + $0x28] sm:$0xf] %vm119, %v245
  %248 = vrot.lane.b32.xlu0 %v24, 80
  %v249 = vpop.permute.xlu0 %248
  %v250 = vrot.slane %v249, 4
  %251 = vst [vmem:[#allocation1] ss:$2 sm:$0xff] %v250
  %v252 = vld.sshfl [vmem:[#allocation1] sm:$0xff pattern:$0x75316420]
  %253 = vrot.lane.b32.xlu0 %v252, 89
  %v254 = vpop.permute.xlu0 %253
  %256 = vst.msk [vmem:[#allocation2 + $0x28] sm:$0xf] %vm129, %v254
  %257 = vrot.lane.b32.xlu0 %v24, 64
  %v258 = vpop.permute.xlu0 %257
  %v259 = vrot.slane %v258, 4
  %260 = vst [vmem:[#allocation1] ss:$2 sm:$0xff] %v259
  %v261 = vld.sshfl [vmem:[#allocation1] sm:$0xff pattern:$0x75316420]
  %262 = vrot.lane.b32.xlu0 %v261, 107
  %v263 = vpop.permute.xlu0 %262
  %265 = vst.msk [vmem:[#allocation2 + $0x28] sm:$0xf] %vm139, %v263
  %266 = vrot.lane.b32.xlu0 %v24, 48
  %v267 = vpop.permute.xlu0 %266
  %v268 = vrot.slane %v267, 4
  %269 = vst [vmem:[#allocation1] ss:$2 sm:$0xff] %v268
  %v270 = vld.sshfl [vmem:[#allocation1] sm:$0xff pattern:$0x75316420]
  %271 = vrot.lane.b32.xlu0 %v270, 125
  %v272 = vpop.permute.xlu0 %271
  %274 = vst.msk [vmem:[#allocation2 + $0x28] sm:$0xf] %vm149, %v272
  %275 = vst.msk [vmem:[#allocation2 + $0x30] sm:$0xf] %vm151, %v272
  %276 = vrot.lane.b32.xlu0 %v24, 32
  %v277 = vpop.permute.xlu0 %276
  %v278 = vrot.slane %v277, 4
  %279 = vst [vmem:[#allocation1] ss:$2 sm:$0xff] %v278
  %v280 = vld.sshfl [vmem:[#allocation1] sm:$0xff pattern:$0x75316420]
  %281 = vrot.lane.b32.xlu0 %v280, 15
  %v282 = vpop.permute.xlu0 %281
  %284 = vst.msk [vmem:[#allocation2 + $0x30] sm:$0xf] %vm161, %v282
  %285 = vrot.lane.b32.xlu0 %v24, 16
  %v286 = vpop.permute.xlu0 %285
  %v287 = vrot.slane %v286, 4
  %288 = vst [vmem:[#allocation1] ss:$2 sm:$0xff] %v287
  %v289 = vld.sshfl [vmem:[#allocation1] sm:$0xff pattern:$0x75316420]
  %290 = vrot.lane.b32.xlu0 %v289, 33
  %v291 = vpop.permute.xlu0 %290
  %293 = vst.msk [vmem:[#allocation2 + $0x30] sm:$0xf] %vm171, %v291
  %v294 = vld [vmem:[%s2] sm:$0xff]
  %v295 = vld [vmem:[#allocation2] sm:$0xff]
  %v296 = vld [vmem:[#allocation2 + $0x8] sm:$0xff]
  %v297 = vld [vmem:[#allocation2 + $0x10] sm:$0xff]
  %v298 = vld [vmem:[#allocation2 + $0x18] sm:$0xff]
  %v299 = vld [vmem:[#allocation2 + $0x20] sm:$0xff]
  %v300 = vld [vmem:[#allocation2 + $0x28] sm:$0xff]
  %v301 = vld [vmem:[#allocation2 + $0x30] sm:$0xff]
  %v302 = vld [vmem:[#allocation2 + $0x8] sm:$0xff]
  %v303 = vld [vmem:[#allocation2 + $0x10] sm:$0xff]
  %v304 = vld [vmem:[#allocation2 + $0x18] sm:$0xff]
  %v305 = vld [vmem:[#allocation2 + $0x20] sm:$0xff]
  %v306 = vld [vmem:[#allocation2 + $0x28] sm:$0xff]
  %v307 = vld [vmem:[#allocation2 + $0x30] sm:$0xff]
  %v308 = vld [vmem:[#allocation2 + $0x38] sm:$0xff]
  %316 = vrot.lane.b32.xlu0 %v295, 127
  %v317 = vpop.permute.xlu0 %316
  %318 = vrot.lane.b32.xlu0 %v296, 127
  %v319 = vpop.permute.xlu0 %318
  %320 = vrot.lane.b32.xlu0 %v297, 127
  %v321 = vpop.permute.xlu0 %320
  %322 = vrot.lane.b32.xlu0 %v298, 127
  %v323 = vpop.permute.xlu0 %322
  %324 = vrot.lane.b32.xlu0 %v299, 127
  %v325 = vpop.permute.xlu0 %324
  %326 = vrot.lane.b32.xlu0 %v300, 127
  %v327 = vpop.permute.xlu0 %326
  %328 = vrot.lane.b32.xlu0 %v301, 127
  %v329 = vpop.permute.xlu0 %328
  %vm330 = vcmask 1039360
  %v331 = vsel %vm330, %v317, %v319
  %v332 = vsel %vm330, %v319, %v321
  %v333 = vsel %vm330, %v321, %v323
  %v334 = vsel %vm330, %v323, %v325
  %v335 = vsel %vm330, %v325, %v327
  %v336 = vsel %vm330, %v327, %v329
  %337 = vrot.lane.b32.xlu0 %v295, 126
  %v338 = vpop.permute.xlu0 %337
  %339 = vrot.lane.b32.xlu0 %v296, 126
  %v340 = vpop.permute.xlu0 %339
  %341 = vrot.lane.b32.xlu0 %v297, 126
  %v342 = vpop.permute.xlu0 %341
  %343 = vrot.lane.b32.xlu0 %v298, 126
  %v344 = vpop.permute.xlu0 %343
  %345 = vrot.lane.b32.xlu0 %v299, 126
  %v346 = vpop.permute.xlu0 %345
  %347 = vrot.lane.b32.xlu0 %v300, 126
  %v348 = vpop.permute.xlu0 %347
  %349 = vrot.lane.b32.xlu0 %v301, 126
  %v350 = vpop.permute.xlu0 %349
  %vm351 = vcmask 1031168
  %v352 = vsel %vm351, %v338, %v340
  %v353 = vsel %vm351, %v340, %v342
  %v354 = vsel %vm351, %v342, %v344
  %v355 = vsel %vm351, %v344, %v346
  %v356 = vsel %vm351, %v346, %v348
  %v357 = vsel %vm351, %v348, %v350
  %358 = vrot.lane.b32.xlu0 %v295, 110
  %v359 = vpop.permute.xlu0 %358
  %360 = vrot.lane.b32.xlu0 %v296, 110
  %v361 = vpop.permute.xlu0 %360
  %362 = vrot.lane.b32.xlu0 %v297, 110
  %v363 = vpop.permute.xlu0 %362
  %364 = vrot.lane.b32.xlu0 %v298, 110
  %v365 = vpop.permute.xlu0 %364
  %366 = vrot.lane.b32.xlu0 %v299, 110
  %v367 = vpop.permute.xlu0 %366
  %368 = vrot.lane.b32.xlu0 %v300, 110
  %v369 = vpop.permute.xlu0 %368
  %370 = vrot.lane.b32.xlu0 %v301, 110
  %v371 = vpop.permute.xlu0 %370
  %vm372 = vcmask 900096
  %v373 = vsel %vm372, %v359, %v361
  %v374 = vsel %vm372, %v361, %v363
  %v375 = vsel %vm372, %v363, %v365
  %v376 = vsel %vm372, %v365, %v367
  %v377 = vsel %vm372, %v367, %v369
  %v378 = vsel %vm372, %v369, %v371
  %379 = vrot.lane.b32.xlu0 %v296, 109
  %v380 = vpop.permute.xlu0 %379
  %381 = vrot.lane.b32.xlu0 %v297, 109
  %v382 = vpop.permute.xlu0 %381
  %383 = vrot.lane.b32.xlu0 %v298, 109
  %v384 = vpop.permute.xlu0 %383
  %385 = vrot.lane.b32.xlu0 %v299, 109
  %v386 = vpop.permute.xlu0 %385
  %387 = vrot.lane.b32.xlu0 %v300, 109
  %v388 = vpop.permute.xlu0 %387
  %389 = vrot.lane.b32.xlu0 %v301, 109
  %v390 = vpop.permute.xlu0 %389
  %vm391 = vcmask 891904
  %v392 = vsel %vm391, %v380, %v382
  %v393 = vsel %vm391, %v382, %v384
  %v394 = vsel %vm391, %v384, %v386
  %v395 = vsel %vm391, %v386, %v388
  %v396 = vsel %vm391, %v388, %v390
  %404 = vrot.lane.b32.xlu0 %v302, 108
  %v405 = vpop.permute.xlu0 %404
  %406 = vrot.lane.b32.xlu0 %v303, 108
  %v407 = vpop.permute.xlu0 %406
  %408 = vrot.lane.b32.xlu0 %v304, 108
  %v409 = vpop.permute.xlu0 %408
  %410 = vrot.lane.b32.xlu0 %v305, 108
  %v411 = vpop.permute.xlu0 %410
  %412 = vrot.lane.b32.xlu0 %v306, 108
  %v413 = vpop.permute.xlu0 %412
  %414 = vrot.lane.b32.xlu0 %v307, 108
  %v415 = vpop.permute.xlu0 %414
  %416 = vrot.lane.b32.xlu0 %v308, 108
  %v417 = vpop.permute.xlu0 %416
  %vm418 = vcmask 883712
  %v419 = vsel %vm418, %v405, %v407
  %v420 = vsel %vm418, %v407, %v409
  %v421 = vsel %vm418, %v409, %v411
  %v422 = vsel %vm418, %v411, %v413
  %v423 = vsel %vm418, %v413, %v415
  %v424 = vsel %vm418, %v415, %v417
  %425 = vrot.lane.b32.xlu0 %v302, 92
  %v426 = vpop.permute.xlu0 %425
  %427 = vrot.lane.b32.xlu0 %v303, 92
  %v428 = vpop.permute.xlu0 %427
  %429 = vrot.lane.b32.xlu0 %v304, 92
  %v430 = vpop.permute.xlu0 %429
  %431 = vrot.lane.b32.xlu0 %v305, 92
  %v432 = vpop.permute.xlu0 %431
  %433 = vrot.lane.b32.xlu0 %v306, 92
  %v434 = vpop.permute.xlu0 %433
  %435 = vrot.lane.b32.xlu0 %v307, 92
  %v436 = vpop.permute.xlu0 %435
  %437 = vrot.lane.b32.xlu0 %v308, 92
  %v438 = vpop.permute.xlu0 %437
  %vm439 = vcmask 752640
  %v440 = vsel %vm439, %v426, %v428
  %v441 = vsel %vm439, %v428, %v430
  %v442 = vsel %vm439, %v430, %v432
  %v443 = vsel %vm439, %v432, %v434
  %v444 = vsel %vm439, %v434, %v436
  %v445 = vsel %vm439, %v436, %v438
  %446 = vrot.lane.b32.xlu0 %v302, 91
  %v447 = vpop.permute.xlu0 %446
  %448 = vrot.lane.b32.xlu0 %v303, 91
  %v449 = vpop.permute.xlu0 %448
  %450 = vrot.lane.b32.xlu0 %v304, 91
  %v451 = vpop.permute.xlu0 %450
  %452 = vrot.lane.b32.xlu0 %v305, 91
  %v453 = vpop.permute.xlu0 %452
  %454 = vrot.lane.b32.xlu0 %v306, 91
  %v455 = vpop.permute.xlu0 %454
  %456 = vrot.lane.b32.xlu0 %v307, 91
  %v457 = vpop.permute.xlu0 %456
  %458 = vrot.lane.b32.xlu0 %v308, 91
  %v459 = vpop.permute.xlu0 %458
  %vm460 = vcmask 744448
  %v461 = vsel %vm460, %v447, %v449
  %v462 = vsel %vm460, %v449, %v451
  %v463 = vsel %vm460, %v451, %v453
  %v464 = vsel %vm460, %v453, %v455
  %v465 = vsel %vm460, %v455, %v457
  %v466 = vsel %vm460, %v457, %v459
  %467 = vrot.lane.b32.xlu0 %v302, 90
  %v468 = vpop.permute.xlu0 %467
  %469 = vrot.lane.b32.xlu0 %v303, 90
  %v470 = vpop.permute.xlu0 %469
  %471 = vrot.lane.b32.xlu0 %v304, 90
  %v472 = vpop.permute.xlu0 %471
  %473 = vrot.lane.b32.xlu0 %v305, 90
  %v474 = vpop.permute.xlu0 %473
  %475 = vrot.lane.b32.xlu0 %v306, 90
  %v476 = vpop.permute.xlu0 %475
  %477 = vrot.lane.b32.xlu0 %v307, 90
  %v478 = vpop.permute.xlu0 %477
  %479 = vrot.lane.b32.xlu0 %v308, 90
  %v480 = vpop.permute.xlu0 %479
  %vm481 = vcmask 736256
  %v482 = vsel %vm481, %v468, %v470
  %v483 = vsel %vm481, %v470, %v472
  %v484 = vsel %vm481, %v472, %v474
  %v485 = vsel %vm481, %v474, %v476
  %v486 = vsel %vm481, %v476, %v478
  %v487 = vsel %vm481, %v478, %v480
  %v488 = vld [vmem:[%s4] sm:$0xff]
  %490 = vset.pattern.permute.xlu0 0
  %491 = vperm.xlu0 %490, %v488
  %v492 = vpop.permute.xlu0 %491
  %494 = vrot.lane.b32.xlu0 %v295, 19
  %v495 = vpop.permute.xlu0 %494
  %496 = vrot.lane.b32.xlu0 %v296, 19
  %v497 = vpop.permute.xlu0 %496
  %498 = vrot.lane.b32.xlu0 %v297, 19
  %v499 = vpop.permute.xlu0 %498
  %500 = vrot.lane.b32.xlu0 %v298, 19
  %v501 = vpop.permute.xlu0 %500
  %502 = vrot.lane.b32.xlu0 %v299, 19
  %v503 = vpop.permute.xlu0 %502
  %504 = vrot.lane.b32.xlu0 %v300, 19
  %v505 = vpop.permute.xlu0 %504
  %506 = vrot.lane.b32.xlu0 %v301, 19
  %v507 = vpop.permute.xlu0 %506
  %508 = vrot.lane.b32.xlu0 %v331, 19
  %v509 = vpop.permute.xlu0 %508
  %510 = vrot.lane.b32.xlu0 %v332, 19
  %v511 = vpop.permute.xlu0 %510
  %512 = vrot.lane.b32.xlu0 %v333, 19
  %v513 = vpop.permute.xlu0 %512
  %514 = vrot.lane.b32.xlu0 %v334, 19
  %v515 = vpop.permute.xlu0 %514
  %516 = vrot.lane.b32.xlu0 %v335, 19
  %v517 = vpop.permute.xlu0 %516
  %518 = vrot.lane.b32.xlu0 %v336, 19
  %v519 = vpop.permute.xlu0 %518
  %520 = vrot.lane.b32.xlu0 %v329, 19
  %v521 = vpop.permute.xlu0 %520
  %522 = vrot.lane.b32.xlu0 %v352, 19
  %v523 = vpop.permute.xlu0 %522
  %524 = vrot.lane.b32.xlu0 %v353, 19
  %v525 = vpop.permute.xlu0 %524
  %526 = vrot.lane.b32.xlu0 %v354, 19
  %v527 = vpop.permute.xlu0 %526
  %528 = vrot.lane.b32.xlu0 %v355, 19
  %v529 = vpop.permute.xlu0 %528
  %530 = vrot.lane.b32.xlu0 %v356, 19
  %v531 = vpop.permute.xlu0 %530
  %532 = vrot.lane.b32.xlu0 %v357, 19
  %v533 = vpop.permute.xlu0 %532
  %534 = vrot.lane.b32.xlu0 %v350, 19
  %v535 = vpop.permute.xlu0 %534
  %536 = vrot.lane.b32.xlu0 %v373, 19
  %v537 = vpop.permute.xlu0 %536
  %538 = vrot.lane.b32.xlu0 %v374, 19
  %v539 = vpop.permute.xlu0 %538
  %540 = vrot.lane.b32.xlu0 %v375, 19
  %v541 = vpop.permute.xlu0 %540
  %542 = vrot.lane.b32.xlu0 %v376, 19
  %v543 = vpop.permute.xlu0 %542
  %544 = vrot.lane.b32.xlu0 %v377, 19
  %v545 = vpop.permute.xlu0 %544
  %546 = vrot.lane.b32.xlu0 %v378, 19
  %v547 = vpop.permute.xlu0 %546
  %548 = vrot.lane.b32.xlu0 %v371, 19
  %v549 = vpop.permute.xlu0 %548
  %550 = vrot.lane.b32.xlu0 %v380, 19
  %v551 = vpop.permute.xlu0 %550
  %552 = vrot.lane.b32.xlu0 %v392, 19
  %v553 = vpop.permute.xlu0 %552
  %554 = vrot.lane.b32.xlu0 %v393, 19
  %v555 = vpop.permute.xlu0 %554
  %556 = vrot.lane.b32.xlu0 %v394, 19
  %v557 = vpop.permute.xlu0 %556
  %558 = vrot.lane.b32.xlu0 %v395, 19
  %v559 = vpop.permute.xlu0 %558
  %560 = vrot.lane.b32.xlu0 %v396, 19
  %v561 = vpop.permute.xlu0 %560
  %562 = vrot.lane.b32.xlu0 %v390, 19
  %v563 = vpop.permute.xlu0 %562
  %564 = vrot.lane.b32.xlu0 %v405, 19
  %v565 = vpop.permute.xlu0 %564
  %566 = vrot.lane.b32.xlu0 %v419, 19
  %v567 = vpop.permute.xlu0 %566
  %568 = vrot.lane.b32.xlu0 %v420, 19
  %v569 = vpop.permute.xlu0 %568
  %570 = vrot.lane.b32.xlu0 %v421, 19
  %v571 = vpop.permute.xlu0 %570
  %572 = vrot.lane.b32.xlu0 %v422, 19
  %v573 = vpop.permute.xlu0 %572
  %574 = vrot.lane.b32.xlu0 %v423, 19
  %v575 = vpop.permute.xlu0 %574
  %576 = vrot.lane.b32.xlu0 %v424, 19
  %v577 = vpop.permute.xlu0 %576
  %578 = vrot.lane.b32.xlu0 %v426, 19
  %v579 = vpop.permute.xlu0 %578
  %580 = vrot.lane.b32.xlu0 %v440, 19
  %v581 = vpop.permute.xlu0 %580
  %582 = vrot.lane.b32.xlu0 %v441, 19
  %v583 = vpop.permute.xlu0 %582
  %584 = vrot.lane.b32.xlu0 %v442, 19
  %v585 = vpop.permute.xlu0 %584
  %586 = vrot.lane.b32.xlu0 %v443, 19
  %v587 = vpop.permute.xlu0 %586
  %588 = vrot.lane.b32.xlu0 %v444, 19
  %v589 = vpop.permute.xlu0 %588
  %590 = vrot.lane.b32.xlu0 %v445, 19
  %v591 = vpop.permute.xlu0 %590
  %592 = vrot.lane.b32.xlu0 %v447, 19
  %v593 = vpop.permute.xlu0 %592
  %594 = vrot.lane.b32.xlu0 %v461, 19
  %v595 = vpop.permute.xlu0 %594
  %596 = vrot.lane.b32.xlu0 %v462, 19
  %v597 = vpop.permute.xlu0 %596
  %598 = vrot.lane.b32.xlu0 %v463, 19
  %v599 = vpop.permute.xlu0 %598
  %600 = vrot.lane.b32.xlu0 %v464, 19
  %v601 = vpop.permute.xlu0 %600
  %602 = vrot.lane.b32.xlu0 %v465, 19
  %v603 = vpop.permute.xlu0 %602
  %604 = vrot.lane.b32.xlu0 %v466, 19
  %v605 = vpop.permute.xlu0 %604
  %606 = vrot.lane.b32.xlu0 %v468, 19
  %v607 = vpop.permute.xlu0 %606
  %608 = vrot.lane.b32.xlu0 %v482, 19
  %v609 = vpop.permute.xlu0 %608
  %610 = vrot.lane.b32.xlu0 %v483, 19
  %v611 = vpop.permute.xlu0 %610
  %612 = vrot.lane.b32.xlu0 %v484, 19
  %v613 = vpop.permute.xlu0 %612
  %614 = vrot.lane.b32.xlu0 %v485, 19
  %v615 = vpop.permute.xlu0 %614
  %616 = vrot.lane.b32.xlu0 %v486, 19
  %v617 = vpop.permute.xlu0 %616
  %618 = vrot.lane.b32.xlu0 %v487, 19
  %v619 = vpop.permute.xlu0 %618
  %vm620 = vcmask 154624
  %v621 = vsel %vm620, %v495, %v497
  %v622 = vsel %vm620, %v497, %v499
  %v623 = vsel %vm620, %v499, %v501
  %v624 = vsel %vm620, %v501, %v503
  %v625 = vsel %vm620, %v503, %v505
  %v626 = vsel %vm620, %v505, %v507
  %v627 = vsel %vm620, %v509, %v511
  %v628 = vsel %vm620, %v511, %v513
  %v629 = vsel %vm620, %v513, %v515
  %v630 = vsel %vm620, %v515, %v517
  %v631 = vsel %vm620, %v517, %v519
  %v632 = vsel %vm620, %v519, %v521
  %v633 = vsel %vm620, %v523, %v525
  %v634 = vsel %vm620, %v525, %v527
  %v635 = vsel %vm620, %v527, %v529
  %v636 = vsel %vm620, %v529, %v531
  %v637 = vsel %vm620, %v531, %v533
  %v638 = vsel %vm620, %v533, %v535
  %v639 = vsel %vm620, %v537, %v539
  %v640 = vsel %vm620, %v539, %v541
  %v641 = vsel %vm620, %v541, %v543
  %v642 = vsel %vm620, %v543, %v545
  %v643 = vsel %vm620, %v545, %v547
  %v644 = vsel %vm620, %v547, %v549
  %v645 = vsel %vm620, %v551, %v553
  %v646 = vsel %vm620, %v553, %v555
  %v647 = vsel %vm620, %v555, %v557
  %v648 = vsel %vm620, %v557, %v559
  %v649 = vsel %vm620, %v559, %v561
  %v650 = vsel %vm620, %v561, %v563
  %v651 = vsel %vm620, %v565, %v567
  %v652 = vsel %vm620, %v567, %v569
  %v653 = vsel %vm620, %v569, %v571
  %v654 = vsel %vm620, %v571, %v573
  %v655 = vsel %vm620, %v573, %v575
  %v656 = vsel %vm620, %v575, %v577
  %v657 = vsel %vm620, %v579, %v581
  %v658 = vsel %vm620, %v581, %v583
  %v659 = vsel %vm620, %v583, %v585
  %v660 = vsel %vm620, %v585, %v587
  %v661 = vsel %vm620, %v587, %v589
  %v662 = vsel %vm620, %v589, %v591
  %v663 = vsel %vm620, %v593, %v595
  %v664 = vsel %vm620, %v595, %v597
  %v665 = vsel %vm620, %v597, %v599
  %v666 = vsel %vm620, %v599, %v601
  %v667 = vsel %vm620, %v601, %v603
  %v668 = vsel %vm620, %v603, %v605
  %v669 = vsel %vm620, %v607, %v609
  %v670 = vsel %vm620, %v609, %v611
  %v671 = vsel %vm620, %v611, %v613
  %v672 = vsel %vm620, %v613, %v615
  %v673 = vsel %vm620, %v615, %v617
  %v674 = vsel %vm620, %v617, %v619
  %vm729 = vcmask 588800
  %v731 = vsel %vm729, %v294, 0
  %733 = vmatpush.msra.mxu0 0.0
  %734 = vmatpush.msra.mxu0 0.0
  %735 = vmatpush.msra.mxu0 0.0
  %736 = vmatpush.msra.mxu0 0.0
  %737 = vmatpush.msra.mxu0 0.0
  %738 = vmatpush.msra.mxu0 0.0
  %739 = vmatpush.msra.mxu0 0.0
  %740 = vmatpush.msra.mxu0 %v669
  %741 = vmatpush.msra.mxu0 %v663
  %742 = vmatpush.msra.mxu0 %v657
  %743 = vmatpush.msra.mxu0 %v651
  %744 = vmatpush.msra.mxu0 %v645
  %745 = vmatpush.msra.mxu0 %v639
  %746 = vmatpush.msra.mxu0 %v633
  %747 = vmatpush.msra.mxu0 %v627
  %748 = vmatpush.msra.mxu0 %v621
  %749 = vmatmul.f32.gmra.mxu0 %v731
  %v750 = vpop.f32.mrf.mxu0
  %v751 = vadd.f32 %v492, %v750
  %752 = vdwg.mxu0
  %753 = vmatpush.msra.mxu0 0.0
  %754 = vmatpush.msra.mxu0 0.0
  %755 = vmatpush.msra.mxu0 0.0
  %756 = vmatpush.msra.mxu0 0.0
  %757 = vmatpush.msra.mxu0 0.0
  %758 = vmatpush.msra.mxu0 0.0
  %759 = vmatpush.msra.mxu0 0.0
  %760 = vmatpush.msra.mxu0 %v670
  %761 = vmatpush.msra.mxu0 %v664
  %762 = vmatpush.msra.mxu0 %v658
  %763 = vmatpush.msra.mxu0 %v652
  %764 = vmatpush.msra.mxu0 %v646
  %765 = vmatpush.msra.mxu0 %v640
  %766 = vmatpush.msra.mxu0 %v634
  %767 = vmatpush.msra.mxu0 %v628
  %768 = vmatpush.msra.mxu0 %v622
  %769 = vmatmul.f32.gmra.mxu0 %v731
  %v770 = vpop.f32.mrf.mxu0
  %v771 = vadd.f32 %v492, %v770
  %772 = vdwg.mxu0
  %773 = vmatpush.msra.mxu0 0.0
  %774 = vmatpush.msra.mxu0 0.0
  %775 = vmatpush.msra.mxu0 0.0
  %776 = vmatpush.msra.mxu0 0.0
  %777 = vmatpush.msra.mxu0 0.0
  %778 = vmatpush.msra.mxu0 0.0
  %779 = vmatpush.msra.mxu0 0.0
  %780 = vmatpush.msra.mxu0 %v671
  %781 = vmatpush.msra.mxu0 %v665
  %782 = vmatpush.msra.mxu0 %v659
  %783 = vmatpush.msra.mxu0 %v653
  %784 = vmatpush.msra.mxu0 %v647
  %785 = vmatpush.msra.mxu0 %v641
  %786 = vmatpush.msra.mxu0 %v635
  %787 = vmatpush.msra.mxu0 %v629
  %788 = vmatpush.msra.mxu0 %v623
  %789 = vmatmul.f32.gmra.mxu0 %v731
  %v790 = vpop.f32.mrf.mxu0
  %v791 = vadd.f32 %v492, %v790
  %792 = vdwg.mxu0
  %793 = vmatpush.msra.mxu0 0.0
  %794 = vmatpush.msra.mxu0 0.0
  %795 = vmatpush.msra.mxu0 0.0
  %796 = vmatpush.msra.mxu0 0.0
  %797 = vmatpush.msra.mxu0 0.0
  %798 = vmatpush.msra.mxu0 0.0
  %799 = vmatpush.msra.mxu0 0.0
  %800 = vmatpush.msra.mxu0 %v672
  %801 = vmatpush.msra.mxu0 %v666
  %802 = vmatpush.msra.mxu0 %v660
  %803 = vmatpush.msra.mxu0 %v654
  %804 = vmatpush.msra.mxu0 %v648
  %805 = vmatpush.msra.mxu0 %v642
  %806 = vmatpush.msra.mxu0 %v636
  %807 = vmatpush.msra.mxu0 %v630
  %808 = vmatpush.msra.mxu0 %v624
  %809 = vmatmul.f32.gmra.mxu0 %v731
  %v810 = vpop.f32.mrf.mxu0
  %v811 = vadd.f32 %v492, %v810
  %812 = vdwg.mxu0
  %813 = vmatpush.msra.mxu0 0.0
  %814 = vmatpush.msra.mxu0 0.0
  %815 = vmatpush.msra.mxu0 0.0
  %816 = vmatpush.msra.mxu0 0.0
  %817 = vmatpush.msra.mxu0 0.0
  %818 = vmatpush.msra.mxu0 0.0
  %819 = vmatpush.msra.mxu0 0.0
  %820 = vmatpush.msra.mxu0 %v673
  %821 = vmatpush.msra.mxu0 %v667
  %822 = vmatpush.msra.mxu0 %v661
  %823 = vmatpush.msra.mxu0 %v655
  %824 = vmatpush.msra.mxu0 %v649
  %825 = vmatpush.msra.mxu0 %v643
  %826 = vmatpush.msra.mxu0 %v637
  %827 = vmatpush.msra.mxu0 %v631
  %828 = vmatpush.msra.mxu0 %v625
  %829 = vmatmul.f32.gmra.mxu0 %v731
  %v830 = vpop.f32.mrf.mxu0
  %v831 = vadd.f32 %v492, %v830
  %832 = vdwg.mxu0
  %833 = vmatpush.msra.mxu0 0.0
  %834 = vmatpush.msra.mxu0 0.0
  %835 = vmatpush.msra.mxu0 0.0
  %836 = vmatpush.msra.mxu0 0.0
  %837 = vmatpush.msra.mxu0 0.0
  %838 = vmatpush.msra.mxu0 0.0
  %839 = vmatpush.msra.mxu0 0.0
  %840 = vmatpush.msra.mxu0 %v674
  %841 = vmatpush.msra.mxu0 %v668
  %842 = vmatpush.msra.mxu0 %v662
  %843 = vmatpush.msra.mxu0 %v656
  %844 = vmatpush.msra.mxu0 %v650
  %845 = vmatpush.msra.mxu0 %v644
  %846 = vmatpush.msra.mxu0 %v638
  %847 = vmatpush.msra.mxu0 %v632
  %848 = vmatpush.msra.mxu0 %v626
  %849 = vmatmul.f32.gmra.mxu0 %v731
  %v850 = vpop.f32.mrf.mxu0
  %v851 = vadd.f32 %v492, %v850
  %852 = vdwg.mxu0
  %v853 = vmax.f32 %v751, 0.0
  %v854 = vmax.f32 %v771, 0.0
  %v855 = vmax.f32 %v791, 0.0
  %v856 = vmax.f32 %v811, 0.0
  %v857 = vmax.f32 %v831, 0.0
  %v858 = vmax.f32 %v851, 0.0
  %v860 = vperm.slane %v25, 0
  %v861 = vperm.slane %v25, 1
  %v862 = vperm.slane %v25, 2
  %v863 = vperm.slane %v25, 3
  %v864 = vperm.slane %v25, 4
  %v865 = vperm.slane %v25, 5
  %v872 = vmul.f32 %v853, %v860
  %v873 = vmul.f32 %v854, %v861
  %v874 = vmul.f32 %v855, %v862
  %v875 = vmul.f32 %v856, %v863
  %v876 = vmul.f32 %v857, %v864
  %v877 = vmul.f32 %v858, %v865
  %878 = vst [vmem:[#allocation2 + $0x8] sm:$0xff] %v872
  %879 = vst [vmem:[#allocation2 + $0x10] sm:$0xff] %v873
  %880 = vst [vmem:[#allocation2 + $0x18] sm:$0xff] %v874
  %881 = vst [vmem:[#allocation2 + $0x20] sm:$0xff] %v875
  %882 = vst [vmem:[#allocation2 + $0x28] sm:$0xff] %v876
  %883 = vst [vmem:[#allocation2 + $0x30] sm:$0xff] %v877
  %v884 = vld [vmem:[%s3] sm:$0xf]
  %v885 = vld [vmem:[#allocation2] sm:$0xff]
  %v886 = vld [vmem:[#allocation2 + $0x8] sm:$0xff]
  %v887 = vld [vmem:[#allocation2 + $0x10] sm:$0xff]
  %v888 = vld [vmem:[#allocation2 + $0x18] sm:$0xff]
  %v889 = vld [vmem:[#allocation2 + $0x20] sm:$0xff]
  %v890 = vld [vmem:[#allocation2 + $0x28] sm:$0xff]
  %v891 = vld [vmem:[#allocation2 + $0x30] sm:$0xff]
  %v892 = vld [vmem:[#allocation2 + $0x8] sm:$0xff]
  %v893 = vld [vmem:[#allocation2 + $0x10] sm:$0xff]
  %v894 = vld [vmem:[#allocation2 + $0x18] sm:$0xff]
  %v895 = vld [vmem:[#allocation2 + $0x20] sm:$0xff]
  %v896 = vld [vmem:[#allocation2 + $0x28] sm:$0xff]
  %v897 = vld [vmem:[#allocation2 + $0x30] sm:$0xff]
  %v898 = vld [vmem:[#allocation2 + $0x38] sm:$0xff]
  %906 = vrot.lane.b32.xlu0 %v885, 127
  %v907 = vpop.permute.xlu0 %906
  %908 = vrot.lane.b32.xlu0 %v886, 127
  %v909 = vpop.permute.xlu0 %908
  %910 = vrot.lane.b32.xlu0 %v887, 127
  %v911 = vpop.permute.xlu0 %910
  %912 = vrot.lane.b32.xlu0 %v888, 127
  %v913 = vpop.permute.xlu0 %912
  %914 = vrot.lane.b32.xlu0 %v889, 127
  %v915 = vpop.permute.xlu0 %914
  %916 = vrot.lane.b32.xlu0 %v890, 127
  %v917 = vpop.permute.xlu0 %916
  %918 = vrot.lane.b32.xlu0 %v891, 127
  %v919 = vpop.permute.xlu0 %918
  %v920 = vsel %vm330, %v907, %v909
  %v921 = vsel %vm330, %v909, %v911
  %v922 = vsel %vm330, %v911, %v913
  %v923 = vsel %vm330, %v913, %v915
  %v924 = vsel %vm330, %v915, %v917
  %v925 = vsel %vm330, %v917, %v919
  %926 = vrot.lane.b32.xlu0 %v885, 126
  %v927 = vpop.permute.xlu0 %926
  %928 = vrot.lane.b32.xlu0 %v886, 126
  %v929 = vpop.permute.xlu0 %928
  %930 = vrot.lane.b32.xlu0 %v887, 126
  %v931 = vpop.permute.xlu0 %930
  %932 = vrot.lane.b32.xlu0 %v888, 126
  %v933 = vpop.permute.xlu0 %932
  %934 = vrot.lane.b32.xlu0 %v889, 126
  %v935 = vpop.permute.xlu0 %934
  %936 = vrot.lane.b32.xlu0 %v890, 126
  %v937 = vpop.permute.xlu0 %936
  %938 = vrot.lane.b32.xlu0 %v891, 126
  %v939 = vpop.permute.xlu0 %938
  %v940 = vsel %vm351, %v927, %v929
  %v941 = vsel %vm351, %v929, %v931
  %v942 = vsel %vm351, %v931, %v933
  %v943 = vsel %vm351, %v933, %v935
  %v944 = vsel %vm351, %v935, %v937
  %v945 = vsel %vm351, %v937, %v939
  %946 = vrot.lane.b32.xlu0 %v885, 110
  %v947 = vpop.permute.xlu0 %946
  %948 = vrot.lane.b32.xlu0 %v886, 110
  %v949 = vpop.permute.xlu0 %948
  %950 = vrot.lane.b32.xlu0 %v887, 110
  %v951 = vpop.permute.xlu0 %950
  %952 = vrot.lane.b32.xlu0 %v888, 110
  %v953 = vpop.permute.xlu0 %952
  %954 = vrot.lane.b32.xlu0 %v889, 110
  %v955 = vpop.permute.xlu0 %954
  %956 = vrot.lane.b32.xlu0 %v890, 110
  %v957 = vpop.permute.xlu0 %956
  %958 = vrot.lane.b32.xlu0 %v891, 110
  %v959 = vpop.permute.xlu0 %958
  %v960 = vsel %vm372, %v947, %v949
  %v961 = vsel %vm372, %v949, %v951
  %v962 = vsel %vm372, %v951, %v953
  %v963 = vsel %vm372, %v953, %v955
  %v964 = vsel %vm372, %v955, %v957
  %v965 = vsel %vm372, %v957, %v959
  %966 = vrot.lane.b32.xlu0 %v886, 109
  %v967 = vpop.permute.xlu0 %966
  %968 = vrot.lane.b32.xlu0 %v887, 109
  %v969 = vpop.permute.xlu0 %968
  %970 = vrot.lane.b32.xlu0 %v888, 109
  %v971 = vpop.permute.xlu0 %970
  %972 = vrot.lane.b32.xlu0 %v889, 109
  %v973 = vpop.permute.xlu0 %972
  %974 = vrot.lane.b32.xlu0 %v890, 109
  %v975 = vpop.permute.xlu0 %974
  %976 = vrot.lane.b32.xlu0 %v891, 109
  %v977 = vpop.permute.xlu0 %976
  %v978 = vsel %vm391, %v967, %v969
  %v979 = vsel %vm391, %v969, %v971
  %v980 = vsel %vm391, %v971, %v973
  %v981 = vsel %vm391, %v973, %v975
  %v982 = vsel %vm391, %v975, %v977
  %990 = vrot.lane.b32.xlu0 %v892, 108
  %v991 = vpop.permute.xlu0 %990
  %992 = vrot.lane.b32.xlu0 %v893, 108
  %v993 = vpop.permute.xlu0 %992
  %994 = vrot.lane.b32.xlu0 %v894, 108
  %v995 = vpop.permute.xlu0 %994
  %996 = vrot.lane.b32.xlu0 %v895, 108
  %v997 = vpop.permute.xlu0 %996
  %998 = vrot.lane.b32.xlu0 %v896, 108
  %v999 = vpop.permute.xlu0 %998
  %1000 = vrot.lane.b32.xlu0 %v897, 108
  %v1001 = vpop.permute.xlu0 %1000
  %1002 = vrot.lane.b32.xlu0 %v898, 108
  %v1003 = vpop.permute.xlu0 %1002
  %v1004 = vsel %vm418, %v991, %v993
  %v1005 = vsel %vm418, %v993, %v995
  %v1006 = vsel %vm418, %v995, %v997
  %v1007 = vsel %vm418, %v997, %v999
  %v1008 = vsel %vm418, %v999, %v1001
  %v1009 = vsel %vm418, %v1001, %v1003
  %1010 = vrot.lane.b32.xlu0 %v892, 92
  %v1011 = vpop.permute.xlu0 %1010
  %1012 = vrot.lane.b32.xlu0 %v893, 92
  %v1013 = vpop.permute.xlu0 %1012
  %1014 = vrot.lane.b32.xlu0 %v894, 92
  %v1015 = vpop.permute.xlu0 %1014
  %1016 = vrot.lane.b32.xlu0 %v895, 92
  %v1017 = vpop.permute.xlu0 %1016
  %1018 = vrot.lane.b32.xlu0 %v896, 92
  %v1019 = vpop.permute.xlu0 %1018
  %1020 = vrot.lane.b32.xlu0 %v897, 92
  %v1021 = vpop.permute.xlu0 %1020
  %1022 = vrot.lane.b32.xlu0 %v898, 92
  %v1023 = vpop.permute.xlu0 %1022
  %v1024 = vsel %vm439, %v1011, %v1013
  %v1025 = vsel %vm439, %v1013, %v1015
  %v1026 = vsel %vm439, %v1015, %v1017
  %v1027 = vsel %vm439, %v1017, %v1019
  %v1028 = vsel %vm439, %v1019, %v1021
  %v1029 = vsel %vm439, %v1021, %v1023
  %1030 = vrot.lane.b32.xlu0 %v892, 91
  %v1031 = vpop.permute.xlu0 %1030
  %1032 = vrot.lane.b32.xlu0 %v893, 91
  %v1033 = vpop.permute.xlu0 %1032
  %1034 = vrot.lane.b32.xlu0 %v894, 91
  %v1035 = vpop.permute.xlu0 %1034
  %1036 = vrot.lane.b32.xlu0 %v895, 91
  %v1037 = vpop.permute.xlu0 %1036
  %1038 = vrot.lane.b32.xlu0 %v896, 91
  %v1039 = vpop.permute.xlu0 %1038
  %1040 = vrot.lane.b32.xlu0 %v897, 91
  %v1041 = vpop.permute.xlu0 %1040
  %1042 = vrot.lane.b32.xlu0 %v898, 91
  %v1043 = vpop.permute.xlu0 %1042
  %v1044 = vsel %vm460, %v1031, %v1033
  %v1045 = vsel %vm460, %v1033, %v1035
  %v1046 = vsel %vm460, %v1035, %v1037
  %v1047 = vsel %vm460, %v1037, %v1039
  %v1048 = vsel %vm460, %v1039, %v1041
  %v1049 = vsel %vm460, %v1041, %v1043
  %1050 = vrot.lane.b32.xlu0 %v892, 90
  %v1051 = vpop.permute.xlu0 %1050
  %1052 = vrot.lane.b32.xlu0 %v893, 90
  %v1053 = vpop.permute.xlu0 %1052
  %1054 = vrot.lane.b32.xlu0 %v894, 90
  %v1055 = vpop.permute.xlu0 %1054
  %1056 = vrot.lane.b32.xlu0 %v895, 90
  %v1057 = vpop.permute.xlu0 %1056
  %1058 = vrot.lane.b32.xlu0 %v896, 90
  %v1059 = vpop.permute.xlu0 %1058
  %1060 = vrot.lane.b32.xlu0 %v897, 90
  %v1061 = vpop.permute.xlu0 %1060
  %1062 = vrot.lane.b32.xlu0 %v898, 90
  %v1063 = vpop.permute.xlu0 %1062
  %v1064 = vsel %vm481, %v1051, %v1053
  %v1065 = vsel %vm481, %v1053, %v1055
  %v1066 = vsel %vm481, %v1055, %v1057
  %v1067 = vsel %vm481, %v1057, %v1059
  %v1068 = vsel %vm481, %v1059, %v1061
  %v1069 = vsel %vm481, %v1061, %v1063
  %v1070 = vld [vmem:[%s5] sm:$0xf]
  %1072 = vset.pattern.permute.xlu0 0
  %1073 = vperm.xlu0 %1072, %v1070
  %v1074 = vpop.permute.xlu0 %1073
  %1076 = vrot.lane.b32.xlu0 %v885, 19
  %v1077 = vpop.permute.xlu0 %1076
  %1078 = vrot.lane.b32.xlu0 %v886, 19
  %v1079 = vpop.permute.xlu0 %1078
  %1080 = vrot.lane.b32.xlu0 %v887, 19
  %v1081 = vpop.permute.xlu0 %1080
  %1082 = vrot.lane.b32.xlu0 %v888, 19
  %v1083 = vpop.permute.xlu0 %1082
  %1084 = vrot.lane.b32.xlu0 %v889, 19
  %v1085 = vpop.permute.xlu0 %1084
  %1086 = vrot.lane.b32.xlu0 %v890, 19
  %v1087 = vpop.permute.xlu0 %1086
  %1088 = vrot.lane.b32.xlu0 %v891, 19
  %v1089 = vpop.permute.xlu0 %1088
  %1090 = vrot.lane.b32.xlu0 %v920, 19
  %v1091 = vpop.permute.xlu0 %1090
  %1092 = vrot.lane.b32.xlu0 %v921, 19
  %v1093 = vpop.permute.xlu0 %1092
  %1094 = vrot.lane.b32.xlu0 %v922, 19
  %v1095 = vpop.permute.xlu0 %1094
  %1096 = vrot.lane.b32.xlu0 %v923, 19
  %v1097 = vpop.permute.xlu0 %1096
  %1098 = vrot.lane.b32.xlu0 %v924, 19
  %v1099 = vpop.permute.xlu0 %1098
  %1100 = vrot.lane.b32.xlu0 %v925, 19
  %v1101 = vpop.permute.xlu0 %1100
  %1102 = vrot.lane.b32.xlu0 %v919, 19
  %v1103 = vpop.permute.xlu0 %1102
  %1104 = vrot.lane.b32.xlu0 %v940, 19
  %v1105 = vpop.permute.xlu0 %1104
  %1106 = vrot.lane.b32.xlu0 %v941, 19
  %v1107 = vpop.permute.xlu0 %1106
  %1108 = vrot.lane.b32.xlu0 %v942, 19
  %v1109 = vpop.permute.xlu0 %1108
  %1110 = vrot.lane.b32.xlu0 %v943, 19
  %v1111 = vpop.permute.xlu0 %1110
  %1112 = vrot.lane.b32.xlu0 %v944, 19
  %v1113 = vpop.permute.xlu0 %1112
  %1114 = vrot.lane.b32.xlu0 %v945, 19
  %v1115 = vpop.permute.xlu0 %1114
  %1116 = vrot.lane.b32.xlu0 %v939, 19
  %v1117 = vpop.permute.xlu0 %1116
  %1118 = vrot.lane.b32.xlu0 %v960, 19
  %v1119 = vpop.permute.xlu0 %1118
  %1120 = vrot.lane.b32.xlu0 %v961, 19
  %v1121 = vpop.permute.xlu0 %1120
  %1122 = vrot.lane.b32.xlu0 %v962, 19
  %v1123 = vpop.permute.xlu0 %1122
  %1124 = vrot.lane.b32.xlu0 %v963, 19
  %v1125 = vpop.permute.xlu0 %1124
  %1126 = vrot.lane.b32.xlu0 %v964, 19
  %v1127 = vpop.permute.xlu0 %1126
  %1128 = vrot.lane.b32.xlu0 %v965, 19
  %v1129 = vpop.permute.xlu0 %1128
  %1130 = vrot.lane.b32.xlu0 %v959, 19
  %v1131 = vpop.permute.xlu0 %1130
  %1132 = vrot.lane.b32.xlu0 %v967, 19
  %v1133 = vpop.permute.xlu0 %1132
  %1134 = vrot.lane.b32.xlu0 %v978, 19
  %v1135 = vpop.permute.xlu0 %1134
  %1136 = vrot.lane.b32.xlu0 %v979, 19
  %v1137 = vpop.permute.xlu0 %1136
  %1138 = vrot.lane.b32.xlu0 %v980, 19
  %v1139 = vpop.permute.xlu0 %1138
  %1140 = vrot.lane.b32.xlu0 %v981, 19
  %v1141 = vpop.permute.xlu0 %1140
  %1142 = vrot.lane.b32.xlu0 %v982, 19
  %v1143 = vpop.permute.xlu0 %1142
  %1144 = vrot.lane.b32.xlu0 %v977, 19
  %v1145 = vpop.permute.xlu0 %1144
  %1146 = vrot.lane.b32.xlu0 %v991, 19
  %v1147 = vpop.permute.xlu0 %1146
  %1148 = vrot.lane.b32.xlu0 %v1004, 19
  %v1149 = vpop.permute.xlu0 %1148
  %1150 = vrot.lane.b32.xlu0 %v1005, 19
  %v1151 = vpop.permute.xlu0 %1150
  %1152 = vrot.lane.b32.xlu0 %v1006, 19
  %v1153 = vpop.permute.xlu0 %1152
  %1154 = vrot.lane.b32.xlu0 %v1007, 19
  %v1155 = vpop.permute.xlu0 %1154
  %1156 = vrot.lane.b32.xlu0 %v1008, 19
  %v1157 = vpop.permute.xlu0 %1156
  %1158 = vrot.lane.b32.xlu0 %v1009, 19
  %v1159 = vpop.permute.xlu0 %1158
  %1160 = vrot.lane.b32.xlu0 %v1011, 19
  %v1161 = vpop.permute.xlu0 %1160
  %1162 = vrot.lane.b32.xlu0 %v1024, 19
  %v1163 = vpop.permute.xlu0 %1162
  %1164 = vrot.lane.b32.xlu0 %v1025, 19
  %v1165 = vpop.permute.xlu0 %1164
  %1166 = vrot.lane.b32.xlu0 %v1026, 19
  %v1167 = vpop.permute.xlu0 %1166
  %1168 = vrot.lane.b32.xlu0 %v1027, 19
  %v1169 = vpop.permute.xlu0 %1168
  %1170 = vrot.lane.b32.xlu0 %v1028, 19
  %v1171 = vpop.permute.xlu0 %1170
  %1172 = vrot.lane.b32.xlu0 %v1029, 19
  %v1173 = vpop.permute.xlu0 %1172
  %1174 = vrot.lane.b32.xlu0 %v1031, 19
  %v1175 = vpop.permute.xlu0 %1174
  %1176 = vrot.lane.b32.xlu0 %v1044, 19
  %v1177 = vpop.permute.xlu0 %1176
  %1178 = vrot.lane.b32.xlu0 %v1045, 19
  %v1179 = vpop.permute.xlu0 %1178
  %1180 = vrot.lane.b32.xlu0 %v1046, 19
  %v1181 = vpop.permute.xlu0 %1180
  %1182 = vrot.lane.b32.xlu0 %v1047, 19
  %v1183 = vpop.permute.xlu0 %1182
  %1184 = vrot.lane.b32.xlu0 %v1048, 19
  %v1185 = vpop.permute.xlu0 %1184
  %1186 = vrot.lane.b32.xlu0 %v1049, 19
  %v1187 = vpop.permute.xlu0 %1186
  %1188 = vrot.lane.b32.xlu0 %v1051, 19
  %v1189 = vpop.permute.xlu0 %1188
  %1190 = vrot.lane.b32.xlu0 %v1064, 19
  %v1191 = vpop.permute.xlu0 %1190
  %1192 = vrot.lane.b32.xlu0 %v1065, 19
  %v1193 = vpop.permute.xlu0 %1192
  %1194 = vrot.lane.b32.xlu0 %v1066, 19
  %v1195 = vpop.permute.xlu0 %1194
  %1196 = vrot.lane.b32.xlu0 %v1067, 19
  %v1197 = vpop.permute.xlu0 %1196
  %1198 = vrot.lane.b32.xlu0 %v1068, 19
  %v1199 = vpop.permute.xlu0 %1198
  %1200 = vrot.lane.b32.xlu0 %v1069, 19
  %v1201 = vpop.permute.xlu0 %1200
  %v1202 = vsel %vm620, %v1077, %v1079
  %v1203 = vsel %vm620, %v1079, %v1081
  %v1204 = vsel %vm620, %v1081, %v1083
  %v1205 = vsel %vm620, %v1083, %v1085
  %v1206 = vsel %vm620, %v1085, %v1087
  %v1207 = vsel %vm620, %v1087, %v1089
  %v1208 = vsel %vm620, %v1091, %v1093
  %v1209 = vsel %vm620, %v1093, %v1095
  %v1210 = vsel %vm620, %v1095, %v1097
  %v1211 = vsel %vm620, %v1097, %v1099
  %v1212 = vsel %vm620, %v1099, %v1101
  %v1213 = vsel %vm620, %v1101, %v1103
  %v1214 = vsel %vm620, %v1105, %v1107
  %v1215 = vsel %vm620, %v1107, %v1109
  %v1216 = vsel %vm620, %v1109, %v1111
  %v1217 = vsel %vm620, %v1111, %v1113
  %v1218 = vsel %vm620, %v1113, %v1115
  %v1219 = vsel %vm620, %v1115, %v1117
  %v1220 = vsel %vm620, %v1119, %v1121
  %v1221 = vsel %vm620, %v1121, %v1123
  %v1222 = vsel %vm620, %v1123, %v1125
  %v1223 = vsel %vm620, %v1125, %v1127
  %v1224 = vsel %vm620, %v1127, %v1129
  %v1225 = vsel %vm620, %v1129, %v1131
  %v1226 = vsel %vm620, %v1133, %v1135
  %v1227 = vsel %vm620, %v1135, %v1137
  %v1228 = vsel %vm620, %v1137, %v1139
  %v1229 = vsel %vm620, %v1139, %v1141
  %v1230 = vsel %vm620, %v1141, %v1143
  %v1231 = vsel %vm620, %v1143, %v1145
  %v1232 = vsel %vm620, %v1147, %v1149
  %v1233 = vsel %vm620, %v1149, %v1151
  %v1234 = vsel %vm620, %v1151, %v1153
  %v1235 = vsel %vm620, %v1153, %v1155
  %v1236 = vsel %vm620, %v1155, %v1157
  %v1237 = vsel %vm620, %v1157, %v1159
  %v1238 = vsel %vm620, %v1161, %v1163
  %v1239 = vsel %vm620, %v1163, %v1165
  %v1240 = vsel %vm620, %v1165, %v1167
  %v1241 = vsel %vm620, %v1167, %v1169
  %v1242 = vsel %vm620, %v1169, %v1171
  %v1243 = vsel %vm620, %v1171, %v1173
  %v1244 = vsel %vm620, %v1175, %v1177
  %v1245 = vsel %vm620, %v1177, %v1179
  %v1246 = vsel %vm620, %v1179, %v1181
  %v1247 = vsel %vm620, %v1181, %v1183
  %v1248 = vsel %vm620, %v1183, %v1185
  %v1249 = vsel %vm620, %v1185, %v1187
  %v1250 = vsel %vm620, %v1189, %v1191
  %v1251 = vsel %vm620, %v1191, %v1193
  %v1252 = vsel %vm620, %v1193, %v1195
  %v1253 = vsel %vm620, %v1195, %v1197
  %v1254 = vsel %vm620, %v1197, %v1199
  %v1255 = vsel %vm620, %v1199, %v1201
  %v1311 = vsel %vm729, %v884, 0
  %1313 = vmatpush.msra.mxu0 0.0
  %1314 = vmatpush.msra.mxu0 0.0
  %1315 = vmatpush.msra.mxu0 0.0
  %1316 = vmatpush.msra.mxu0 0.0
  %1317 = vmatpush.msra.mxu0 0.0
  %1318 = vmatpush.msra.mxu0 0.0
  %1319 = vmatpush.msra.mxu0 0.0
  %1320 = vmatpush.msra.mxu0 %v1250
  %1321 = vmatpush.msra.mxu0 %v1244
  %1322 = vmatpush.msra.mxu0 %v1238
  %1323 = vmatpush.msra.mxu0 %v1232
  %1324 = vmatpush.msra.mxu0 %v1226
  %1325 = vmatpush.msra.mxu0 %v1220
  %1326 = vmatpush.msra.mxu0 %v1214
  %1327 = vmatpush.msra.mxu0 %v1208
  %1328 = vmatpush.msra.mxu0 %v1202
  %1329 = vmatmul.f32.gmra.mxu0 %v1311
  %v1330 = vpop.f32.mrf.mxu0
  %v1331 = vadd.f32 %v1074, %v1330
  %1332 = vdwg.mxu0
  %1333 = vmatpush.msra.mxu0 0.0
  %1334 = vmatpush.msra.mxu0 0.0
  %1335 = vmatpush.msra.mxu0 0.0
  %1336 = vmatpush.msra.mxu0 0.0
  %1337 = vmatpush.msra.mxu0 0.0
  %1338 = vmatpush.msra.mxu0 0.0
  %1339 = vmatpush.msra.mxu0 0.0
  %1340 = vmatpush.msra.mxu0 %v1251
  %1341 = vmatpush.msra.mxu0 %v1245
  %1342 = vmatpush.msra.mxu0 %v1239
  %1343 = vmatpush.msra.mxu0 %v1233
  %1344 = vmatpush.msra.mxu0 %v1227
  %1345 = vmatpush.msra.mxu0 %v1221
  %1346 = vmatpush.msra.mxu0 %v1215
  %1347 = vmatpush.msra.mxu0 %v1209
  %1348 = vmatpush.msra.mxu0 %v1203
  %1349 = vmatmul.f32.gmra.mxu0 %v1311
  %v1350 = vpop.f32.mrf.mxu0
  %v1351 = vadd.f32 %v1074, %v1350
  %1352 = vdwg.mxu0
  %1353 = vmatpush.msra.mxu0 0.0
  %1354 = vmatpush.msra.mxu0 0.0
  %1355 = vmatpush.msra.mxu0 0.0
  %1356 = vmatpush.msra.mxu0 0.0
  %1357 = vmatpush.msra.mxu0 0.0
  %1358 = vmatpush.msra.mxu0 0.0
  %1359 = vmatpush.msra.mxu0 0.0
  %1360 = vmatpush.msra.mxu0 %v1252
  %1361 = vmatpush.msra.mxu0 %v1246
  %1362 = vmatpush.msra.mxu0 %v1240
  %1363 = vmatpush.msra.mxu0 %v1234
  %1364 = vmatpush.msra.mxu0 %v1228
  %1365 = vmatpush.msra.mxu0 %v1222
  %1366 = vmatpush.msra.mxu0 %v1216
  %1367 = vmatpush.msra.mxu0 %v1210
  %1368 = vmatpush.msra.mxu0 %v1204
  %1369 = vmatmul.f32.gmra.mxu0 %v1311
  %v1370 = vpop.f32.mrf.mxu0
  %v1371 = vadd.f32 %v1074, %v1370
  %1372 = vdwg.mxu0
  %1373 = vmatpush.msra.mxu0 0.0
  %1374 = vmatpush.msra.mxu0 0.0
  %1375 = vmatpush.msra.mxu0 0.0
  %1376 = vmatpush.msra.mxu0 0.0
  %1377 = vmatpush.msra.mxu0 0.0
  %1378 = vmatpush.msra.mxu0 0.0
  %1379 = vmatpush.msra.mxu0 0.0
  %1380 = vmatpush.msra.mxu0 %v1253
  %1381 = vmatpush.msra.mxu0 %v1247
  %1382 = vmatpush.msra.mxu0 %v1241
  %1383 = vmatpush.msra.mxu0 %v1235
  %1384 = vmatpush.msra.mxu0 %v1229
  %1385 = vmatpush.msra.mxu0 %v1223
  %1386 = vmatpush.msra.mxu0 %v1217
  %1387 = vmatpush.msra.mxu0 %v1211
  %1388 = vmatpush.msra.mxu0 %v1205
  %1389 = vmatmul.f32.gmra.mxu0 %v1311
  %v1390 = vpop.f32.mrf.mxu0
  %v1391 = vadd.f32 %v1074, %v1390
  %1392 = vdwg.mxu0
  %1393 = vmatpush.msra.mxu0 0.0
  %1394 = vmatpush.msra.mxu0 0.0
  %1395 = vmatpush.msra.mxu0 0.0
  %1396 = vmatpush.msra.mxu0 0.0
  %1397 = vmatpush.msra.mxu0 0.0
  %1398 = vmatpush.msra.mxu0 0.0
  %1399 = vmatpush.msra.mxu0 0.0
  %1400 = vmatpush.msra.mxu0 %v1254
  %1401 = vmatpush.msra.mxu0 %v1248
  %1402 = vmatpush.msra.mxu0 %v1242
  %1403 = vmatpush.msra.mxu0 %v1236
  %1404 = vmatpush.msra.mxu0 %v1230
  %1405 = vmatpush.msra.mxu0 %v1224
  %1406 = vmatpush.msra.mxu0 %v1218
  %1407 = vmatpush.msra.mxu0 %v1212
  %1408 = vmatpush.msra.mxu0 %v1206
  %1409 = vmatmul.f32.gmra.mxu0 %v1311
  %v1410 = vpop.f32.mrf.mxu0
  %v1411 = vadd.f32 %v1074, %v1410
  %1412 = vdwg.mxu0
  %1413 = vmatpush.msra.mxu0 0.0
  %1414 = vmatpush.msra.mxu0 0.0
  %1415 = vmatpush.msra.mxu0 0.0
  %1416 = vmatpush.msra.mxu0 0.0
  %1417 = vmatpush.msra.mxu0 0.0
  %1418 = vmatpush.msra.mxu0 0.0
  %1419 = vmatpush.msra.mxu0 0.0
  %1420 = vmatpush.msra.mxu0 %v1255
  %1421 = vmatpush.msra.mxu0 %v1249
  %1422 = vmatpush.msra.mxu0 %v1243
  %1423 = vmatpush.msra.mxu0 %v1237
  %1424 = vmatpush.msra.mxu0 %v1231
  %1425 = vmatpush.msra.mxu0 %v1225
  %1426 = vmatpush.msra.mxu0 %v1219
  %1427 = vmatpush.msra.mxu0 %v1213
  %1428 = vmatpush.msra.mxu0 %v1207
  %1429 = vmatmul.f32.gmra.mxu0 %v1311
  %v1430 = vpop.f32.mrf.mxu0
  %v1431 = vadd.f32 %v1074, %v1430
  %1432 = vdwg.mxu0
  %1433 = vst [vmem:[#allocation1] ss:$2 sm:$0xff] %v23
  %v1434 = vld.sshfl [vmem:[#allocation1] sm:$0xff pattern:$0x75316420]
  %1435 = vrot.lane.b32.xlu0 %v1434, 19
  %v1436 = vpop.permute.xlu0 %1435
  %v1438 = vadd.f32 %v1331, %v1436
  %1439 = vst [vmem:[#allocation1] ss:$2 sm:$0xff] %v23
  %v1440 = vld.sshfl [vmem:[#allocation1] sm:$0xff pattern:$0x75316420]
  %1441 = vrot.lane.b32.xlu0 %v1440, 21
  %v1442 = vpop.permute.xlu0 %1441
  %v1444 = vadd.f32 %v1331, %v1442
  %1445 = vst [vmem:[#allocation1] ss:$2 sm:$0xff] %v23
  %v1446 = vld.sshfl [vmem:[#allocation1] sm:$0xff pattern:$0x75316420]
  %1447 = vrot.lane.b32.xlu0 %v1446, 23
  %v1448 = vpop.permute.xlu0 %1447
  %v1450 = vadd.f32 %v1331, %v1448
  %1451 = vst [vmem:[#allocation1] ss:$2 sm:$0xff] %v23
  %v1452 = vld.sshfl [vmem:[#allocation1] sm:$0xff pattern:$0x75316420]
  %1453 = vrot.lane.b32.xlu0 %v1452, 25
  %v1454 = vpop.permute.xlu0 %1453
  %v1456 = vadd.f32 %v1331, %v1454
  %1457 = vst [vmem:[#allocation1] ss:$2 sm:$0xff] %v23
  %v1458 = vld.sshfl [vmem:[#allocation1] sm:$0xff pattern:$0x75316420]
  %1459 = vrot.lane.b32.xlu0 %v1458, 27
  %v1460 = vpop.permute.xlu0 %1459
  %v1462 = vadd.f32 %v1331, %v1460
  %1463 = vst [vmem:[#allocation1] ss:$2 sm:$0xff] %v23
  %v1464 = vld.sshfl [vmem:[#allocation1] sm:$0xff pattern:$0x75316420]
  %1465 = vrot.lane.b32.xlu0 %v1464, 29
  %v1466 = vpop.permute.xlu0 %1465
  %v1468 = vadd.f32 %v1331, %v1466
  %1469 = vst [vmem:[#allocation1] ss:$2 sm:$0xff] %v23
  %v1470 = vld.sshfl [vmem:[#allocation1] sm:$0xff pattern:$0x75316420]
  %1471 = vrot.lane.b32.xlu0 %v1470, 31
  %v1472 = vpop.permute.xlu0 %1471
  %v1474 = vadd.f32 %v1331, %v1472
  %v1475 = vadd.f32 %v1351, %v1472
  %1476 = vst [vmem:[#allocation1] ss:$2 sm:$0xff] %v23
  %v1477 = vld.sshfl [vmem:[#allocation1] sm:$0xff pattern:$0x75316420]
  %1478 = vrot.lane.b32.xlu0 %v1477, 33
  %v1479 = vpop.permute.xlu0 %1478
  %v1481 = vadd.f32 %v1351, %v1479
  %1482 = vst [vmem:[#allocation1] ss:$2 sm:$0xff] %v93
  %v1483 = vld.sshfl [vmem:[#allocation1] sm:$0xff pattern:$0x75316420]
  %1484 = vrot.lane.b32.xlu0 %v1483, 35
  %v1485 = vpop.permute.xlu0 %1484
  %v1487 = vadd.f32 %v1351, %v1485
  %1488 = vst [vmem:[#allocation1] ss:$2 sm:$0xff] %v103
  %v1489 = vld.sshfl [vmem:[#allocation1] sm:$0xff pattern:$0x75316420]
  %1490 = vrot.lane.b32.xlu0 %v1489, 53
  %v1491 = vpop.permute.xlu0 %1490
  %v1493 = vadd.f32 %v1351, %v1491
  %1494 = vst [vmem:[#allocation1] ss:$2 sm:$0xff] %v113
  %v1495 = vld.sshfl [vmem:[#allocation1] sm:$0xff pattern:$0x75316420]
  %1496 = vrot.lane.b32.xlu0 %v1495, 71
  %v1497 = vpop.permute.xlu0 %1496
  %v1499 = vadd.f32 %v1351, %v1497
  %1500 = vst [vmem:[#allocation1] ss:$2 sm:$0xff] %v123
  %v1501 = vld.sshfl [vmem:[#allocation1] sm:$0xff pattern:$0x75316420]
  %1502 = vrot.lane.b32.xlu0 %v1501, 89
  %v1503 = vpop.permute.xlu0 %1502
  %v1505 = vadd.f32 %v1351, %v1503
  %1506 = vst [vmem:[#allocation1] ss:$2 sm:$0xff] %v133
  %v1507 = vld.sshfl [vmem:[#allocation1] sm:$0xff pattern:$0x75316420]
  %1508 = vrot.lane.b32.xlu0 %v1507, 107
  %v1509 = vpop.permute.xlu0 %1508
  %v1511 = vadd.f32 %v1351, %v1509
  %1512 = vst [vmem:[#allocation1] ss:$2 sm:$0xff] %v143
  %v1513 = vld.sshfl [vmem:[#allocation1] sm:$0xff pattern:$0x75316420]
  %1514 = vrot.lane.b32.xlu0 %v1513, 125
  %v1515 = vpop.permute.xlu0 %1514
  %v1517 = vadd.f32 %v1351, %v1515
  %v1518 = vadd.f32 %v1371, %v1515
  %1519 = vst [vmem:[#allocation1] ss:$2 sm:$0xff] %v155
  %v1520 = vld.sshfl [vmem:[#allocation1] sm:$0xff pattern:$0x75316420]
  %1521 = vrot.lane.b32.xlu0 %v1520, 15
  %v1522 = vpop.permute.xlu0 %1521
  %v1524 = vadd.f32 %v1371, %v1522
  %1525 = vst [vmem:[#allocation1] ss:$2 sm:$0xff] %v165
  %v1526 = vld.sshfl [vmem:[#allocation1] sm:$0xff pattern:$0x75316420]
  %1527 = vrot.lane.b32.xlu0 %v1526, 33
  %v1528 = vpop.permute.xlu0 %1527
  %v1530 = vadd.f32 %v1371, %v1528
  %1532 = vrot.lane.b32.xlu0 %v1438, 109
  %v1533 = vpop.permute.xlu0 %1532
  %1536 = vrot.lane.b32.xlu0 %v1444, 107
  %v1537 = vpop.permute.xlu0 %1536
  %1540 = vrot.lane.b32.xlu0 %v1450, 105
  %v1541 = vpop.permute.xlu0 %1540
  %1544 = vrot.lane.b32.xlu0 %v1456, 103
  %v1545 = vpop.permute.xlu0 %1544
  %1548 = vrot.lane.b32.xlu0 %v1462, 101
  %v1549 = vpop.permute.xlu0 %1548
  %1552 = vrot.lane.b32.xlu0 %v1468, 99
  %v1553 = vpop.permute.xlu0 %1552
  %1557 = vrot.lane.b32.xlu0 %v1474, 97
  %v1558 = vpop.permute.xlu0 %1557
  %1559 = vrot.lane.b32.xlu0 %v1475, 97
  %v1560 = vpop.permute.xlu0 %1559
  %vm1561 = vcmask 793600
  %v1562 = vsel %vm1561, %v1558, %v1560
  %1565 = vrot.lane.b32.xlu0 %v1481, 95
  %v1566 = vpop.permute.xlu0 %1565
  %1569 = vrot.lane.b32.xlu0 %v1487, 93
  %v1570 = vpop.permute.xlu0 %1569
  %1573 = vrot.lane.b32.xlu0 %v1493, 91
  %v1574 = vpop.permute.xlu0 %1573
  %1577 = vrot.lane.b32.xlu0 %v1499, 89
  %v1578 = vpop.permute.xlu0 %1577
  %1581 = vrot.lane.b32.xlu0 %v1505, 87
  %v1582 = vpop.permute.xlu0 %1581
  %1585 = vrot.lane.b32.xlu0 %v1511, 85
  %v1586 = vpop.permute.xlu0 %1585
  %1590 = vrot.lane.b32.xlu0 %v1517, 83
  %v1591 = vpop.permute.xlu0 %1590
  %1592 = vrot.lane.b32.xlu0 %v1518, 83
  %v1593 = vpop.permute.xlu0 %1592
  %vm1594 = vcmask 678912
  %v1595 = vsel %vm1594, %v1591, %v1593
  %1598 = vrot.lane.b32.xlu0 %v1524, 81
  %v1599 = vpop.permute.xlu0 %1598
  %1602 = vrot.lane.b32.xlu0 %v1530, 79
  %v1603 = vpop.permute.xlu0 %1602
  %vm1605 = vcmask 130048
  %v1606 = vsel %vm1605, %v1533, %v1537
  %vm1607 = vcmask 261120
  %v1608 = vsel %vm1607, %v1606, %v1541
  %vm1609 = vcmask 392192
  %v1610 = vsel %vm1609, %v1608, %v1545
  %vm1611 = vcmask 523264
  %v1612 = vsel %vm1611, %v1610, %v1549
  %vm1613 = vcmask 654336
  %v1614 = vsel %vm1613, %v1612, %v1553
  %vm1615 = vcmask 785408
  %v1616 = vsel %vm1615, %v1614, %v1562
  %vm1617 = vcmask 916480
  %v1618 = vsel %vm1617, %v1616, %v1566
  %v1619 = vsel %vm1605, %v1570, %v1574
  %v1620 = vsel %vm1607, %v1619, %v1578
  %v1621 = vsel %vm1609, %v1620, %v1582
  %v1622 = vsel %vm1611, %v1621, %v1586
  %v1623 = vsel %vm1613, %v1622, %v1595
  %v1624 = vsel %vm1615, %v1623, %v1599
  %v1625 = vsel %vm1617, %v1624, %v1603
  %v1626 = vmax.f32 %v1618, 0.0
  %v1627 = vmax.f32 %v1625, 0.0
  %v1630 = vrot.slane %v1627, 4
  %vm1631 = vcmask 1043456
  %v1632 = vsel %vm1631, %v1626, %v1630
  %1634 = vst [vmem:[%s6] sm:$0xff] %v1632
  %1635 = vst [vmem:[#allocation1] ss:$2 sm:$0xff] %v24
  %v1636 = vld.sshfl [vmem:[#allocation1] sm:$0xff pattern:$0x75316420]
  %1637 = vrot.lane.b32.xlu0 %v1636, 19
  %v1638 = vpop.permute.xlu0 %1637
  %v1640 = vadd.f32 %v1391, %v1638
  %1641 = vst [vmem:[#allocation1] ss:$2 sm:$0xff] %v24
  %v1642 = vld.sshfl [vmem:[#allocation1] sm:$0xff pattern:$0x75316420]
  %1643 = vrot.lane.b32.xlu0 %v1642, 21
  %v1644 = vpop.permute.xlu0 %1643
  %v1646 = vadd.f32 %v1391, %v1644
  %1647 = vst [vmem:[#allocation1] ss:$2 sm:$0xff] %v24
  %v1648 = vld.sshfl [vmem:[#allocation1] sm:$0xff pattern:$0x75316420]
  %1649 = vrot.lane.b32.xlu0 %v1648, 23
  %v1650 = vpop.permute.xlu0 %1649
  %v1652 = vadd.f32 %v1391, %v1650
  %1653 = vst [vmem:[#allocation1] ss:$2 sm:$0xff] %v24
  %v1654 = vld.sshfl [vmem:[#allocation1] sm:$0xff pattern:$0x75316420]
  %1655 = vrot.lane.b32.xlu0 %v1654, 25
  %v1656 = vpop.permute.xlu0 %1655
  %v1658 = vadd.f32 %v1391, %v1656
  %1659 = vst [vmem:[#allocation1] ss:$2 sm:$0xff] %v24
  %v1660 = vld.sshfl [vmem:[#allocation1] sm:$0xff pattern:$0x75316420]
  %1661 = vrot.lane.b32.xlu0 %v1660, 27
  %v1662 = vpop.permute.xlu0 %1661
  %v1664 = vadd.f32 %v1391, %v1662
  %1665 = vst [vmem:[#allocation1] ss:$2 sm:$0xff] %v24
  %v1666 = vld.sshfl [vmem:[#allocation1] sm:$0xff pattern:$0x75316420]
  %1667 = vrot.lane.b32.xlu0 %v1666, 29
  %v1668 = vpop.permute.xlu0 %1667
  %v1670 = vadd.f32 %v1391, %v1668
  %1671 = vst [vmem:[#allocation1] ss:$2 sm:$0xff] %v24
  %v1672 = vld.sshfl [vmem:[#allocation1] sm:$0xff pattern:$0x75316420]
  %1673 = vrot.lane.b32.xlu0 %v1672, 31
  %v1674 = vpop.permute.xlu0 %1673
  %v1676 = vadd.f32 %v1391, %v1674
  %v1677 = vadd.f32 %v1411, %v1674
  %1678 = vst [vmem:[#allocation1] ss:$2 sm:$0xff] %v24
  %v1679 = vld.sshfl [vmem:[#allocation1] sm:$0xff pattern:$0x75316420]
  %1680 = vrot.lane.b32.xlu0 %v1679, 33
  %v1681 = vpop.permute.xlu0 %1680
  %v1683 = vadd.f32 %v1411, %v1681
  %1684 = vst [vmem:[#allocation1] ss:$2 sm:$0xff] %v223
  %v1685 = vld.sshfl [vmem:[#allocation1] sm:$0xff pattern:$0x75316420]
  %1686 = vrot.lane.b32.xlu0 %v1685, 35
  %v1687 = vpop.permute.xlu0 %1686
  %v1689 = vadd.f32 %v1411, %v1687
  %1690 = vst [vmem:[#allocation1] ss:$2 sm:$0xff] %v232
  %v1691 = vld.sshfl [vmem:[#allocation1] sm:$0xff pattern:$0x75316420]
  %1692 = vrot.lane.b32.xlu0 %v1691, 53
  %v1693 = vpop.permute.xlu0 %1692
  %v1695 = vadd.f32 %v1411, %v1693
  %1696 = vst [vmem:[#allocation1] ss:$2 sm:$0xff] %v241
  %v1697 = vld.sshfl [vmem:[#allocation1] sm:$0xff pattern:$0x75316420]
  %1698 = vrot.lane.b32.xlu0 %v1697, 71
  %v1699 = vpop.permute.xlu0 %1698
  %v1701 = vadd.f32 %v1411, %v1699
  %1702 = vst [vmem:[#allocation1] ss:$2 sm:$0xff] %v250
  %v1703 = vld.sshfl [vmem:[#allocation1] sm:$0xff pattern:$0x75316420]
  %1704 = vrot.lane.b32.xlu0 %v1703, 89
  %v1705 = vpop.permute.xlu0 %1704
  %v1707 = vadd.f32 %v1411, %v1705
  %1708 = vst [vmem:[#allocation1] ss:$2 sm:$0xff] %v259
  %v1709 = vld.sshfl [vmem:[#allocation1] sm:$0xff pattern:$0x75316420]
  %1710 = vrot.lane.b32.xlu0 %v1709, 107
  %v1711 = vpop.permute.xlu0 %1710
  %v1713 = vadd.f32 %v1411, %v1711
  %1714 = vst [vmem:[#allocation1] ss:$2 sm:$0xff] %v268
  %v1715 = vld.sshfl [vmem:[#allocation1] sm:$0xff pattern:$0x75316420]
  %1716 = vrot.lane.b32.xlu0 %v1715, 125
  %v1717 = vpop.permute.xlu0 %1716
  %v1719 = vadd.f32 %v1411, %v1717
  %v1720 = vadd.f32 %v1431, %v1717
  %1721 = vst [vmem:[#allocation1] ss:$2 sm:$0xff] %v278
  %v1722 = vld.sshfl [vmem:[#allocation1] sm:$0xff pattern:$0x75316420]
  %1723 = vrot.lane.b32.xlu0 %v1722, 15
  %v1724 = vpop.permute.xlu0 %1723
  %v1726 = vadd.f32 %v1431, %v1724
  %1727 = vst [vmem:[#allocation1] ss:$2 sm:$0xff] %v287
  %v1728 = vld.sshfl [vmem:[#allocation1] sm:$0xff pattern:$0x75316420]
  %1729 = vrot.lane.b32.xlu0 %v1728, 33
  %v1730 = vpop.permute.xlu0 %1729
  %v1732 = vadd.f32 %v1431, %v1730
  %1734 = vrot.lane.b32.xlu0 %v1640, 109
  %v1735 = vpop.permute.xlu0 %1734
  %1738 = vrot.lane.b32.xlu0 %v1646, 107
  %v1739 = vpop.permute.xlu0 %1738
  %1742 = vrot.lane.b32.xlu0 %v1652, 105
  %v1743 = vpop.permute.xlu0 %1742
  %1746 = vrot.lane.b32.xlu0 %v1658, 103
  %v1747 = vpop.permute.xlu0 %1746
  %1750 = vrot.lane.b32.xlu0 %v1664, 101
  %v1751 = vpop.permute.xlu0 %1750
  %1754 = vrot.lane.b32.xlu0 %v1670, 99
  %v1755 = vpop.permute.xlu0 %1754
  %1759 = vrot.lane.b32.xlu0 %v1676, 97
  %v1760 = vpop.permute.xlu0 %1759
  %1761 = vrot.lane.b32.xlu0 %v1677, 97
  %v1762 = vpop.permute.xlu0 %1761
  %v1763 = vsel %vm1561, %v1760, %v1762
  %1766 = vrot.lane.b32.xlu0 %v1683, 95
  %v1767 = vpop.permute.xlu0 %1766
  %1770 = vrot.lane.b32.xlu0 %v1689, 93
  %v1771 = vpop.permute.xlu0 %1770
  %1774 = vrot.lane.b32.xlu0 %v1695, 91
  %v1775 = vpop.permute.xlu0 %1774
  %1778 = vrot.lane.b32.xlu0 %v1701, 89
  %v1779 = vpop.permute.xlu0 %1778
  %1782 = vrot.lane.b32.xlu0 %v1707, 87
  %v1783 = vpop.permute.xlu0 %1782
  %1786 = vrot.lane.b32.xlu0 %v1713, 85
  %v1787 = vpop.permute.xlu0 %1786
  %1791 = vrot.lane.b32.xlu0 %v1719, 83
  %v1792 = vpop.permute.xlu0 %1791
  %1793 = vrot.lane.b32.xlu0 %v1720, 83
  %v1794 = vpop.permute.xlu0 %1793
  %v1795 = vsel %vm1594, %v1792, %v1794
  %1798 = vrot.lane.b32.xlu0 %v1726, 81
  %v1799 = vpop.permute.xlu0 %1798
  %1802 = vrot.lane.b32.xlu0 %v1732, 79
  %v1803 = vpop.permute.xlu0 %1802
  %v1805 = vsel %vm1605, %v1735, %v1739
  %v1806 = vsel %vm1607, %v1805, %v1743
  %v1807 = vsel %vm1609, %v1806, %v1747
  %v1808 = vsel %vm1611, %v1807, %v1751
  %v1809 = vsel %vm1613, %v1808, %v1755
  %v1810 = vsel %vm1615, %v1809, %v1763
  %v1811 = vsel %vm1617, %v1810, %v1767
  %v1812 = vsel %vm1605, %v1771, %v1775
  %v1813 = vsel %vm1607, %v1812, %v1779
  %v1814 = vsel %vm1609, %v1813, %v1783
  %v1815 = vsel %vm1611, %v1814, %v1787
  %v1816 = vsel %vm1613, %v1815, %v1795
  %v1817 = vsel %vm1615, %v1816, %v1799
  %v1818 = vsel %vm1617, %v1817, %v1803
  %v1819 = vmax.f32 %v1811, 0.0
  %v1820 = vmax.f32 %v1818, 0.0
  %v1823 = vrot.slane %v1820, 4
  %v1824 = vsel %vm1631, %v1819, %v1823
  %s1826 = scalar_lea.vmem %s6, 8
  %1827 = vst [vmem:[%s1826] sm:$0xff] %v1824
  // Predicated region
  $region26: #{resbl_forward.1} parent=0 // pred_check
    _
  $region27: #{resbl_forward.1} parent=0 // pred_check_branch
    %1829 = sbr.rel (0) target = $region29
  $region28: #{resbl_forward.1} parent=0 // pred_region
    _
  $region29: #{resbl_forward.1} parent=0 // pred_fallthru
    _
  // Predicated region
  $region30: #{resbl_forward.1} parent=0 // pred_check
    _
  $region31: #{resbl_forward.1} parent=0 // pred_check_branch
    %1831 = sbr.rel (0) target = $region33
  $region32: #{resbl_forward.1} parent=0 // pred_region
    _
  $region33: #{resbl_forward.1} parent=0 // pred_fallthru
    _

</llo_original>
